<compile_context>
chip_gen: v5e
topology: v5e:2x2
jax: 0.10.0
libtpu: 0.0.40
codegen_flags: <defaults>
</compile_context>

<pallas_src>
import functools

import jax
import jax.numpy as jnp
import numpy as np
from jax.experimental import pallas as pl
from jax.experimental.pallas import tpu as pltpu


def msdc_kernel(x_ref, w3_ref, b3_ref, w5_ref, b5_ref, w7_ref, b7_ref,
                wpw_ref, bpw_ref, wa1_ref, ba1_ref, wa2_ref, ba2_ref,
                colpre_ref, rowpost_ref, out_ref, *, G, C, H, W):
    HW = H * W
    x = x_ref[...]                                   # (G*C, H*W) f32
    w3 = w3_ref[...]                                 # (G*C, 9)
    w5 = w5_ref[...]                                 # (G*C, 25)
    w7 = w7_ref[...]                                 # (G*C, 49)

    # Column-premasked copies of x, one per horizontal offset dx in [-3, 3].
    # Zeroing the source columns that are only reachable through a lane wrap
    # makes the flattened roll below exactly a zero-padded horizontal shift.
    xc = []
    for dx in range(-3, 4):
        if dx == 0:
            xc.append(x)
        else:
            xc.append(x * colpre_ref[dx + 3:dx + 4, :])

    acc3 = jnp.zeros_like(x)
    acc5 = jnp.zeros_like(x)
    acc7 = jnp.zeros_like(x)

    for dy in range(-3, 4):
        part7 = jnp.zeros_like(x)
        part5 = jnp.zeros_like(x) if abs(dy) <= 2 else None
        part3 = jnp.zeros_like(x) if abs(dy) <= 1 else None
        for dx in range(-3, 4):
            shift = (-(dy * W + dx)) % HW
            src = xc[dx + 3]
            r = src if shift == 0 else pltpu.roll(src, shift=shift, axis=1)
            t7 = (dy + 3) * 7 + (dx + 3)
            part7 = part7 + w7[:, t7:t7 + 1] * r
            if abs(dy) <= 2 and abs(dx) <= 2:
                t5 = (dy + 2) * 5 + (dx + 2)
                part5 = part5 + w5[:, t5:t5 + 1] * r
            if abs(dy) <= 1 and abs(dx) <= 1:
                t3 = (dy + 1) * 3 + (dx + 1)
                part3 = part3 + w3[:, t3:t3 + 1] * r
        # Vertical offsets only wrap around the whole image; zero those output
        # rows once per dy (shared across all dx taps and all live branches).
        rm = rowpost_ref[dy + 3:dy + 4, :]           # (1, H*W)
        acc7 = acc7 + rm * part7
        if part5 is not None:
            acc5 = acc5 + rm * part5
        if part3 is not None:
            acc3 = acc3 + rm * part3

    x3 = acc3 + b3_ref[...]                          # (G*C, H*W)
    x5 = acc5 + b5_ref[...]
    x7 = acc7 + b7_ref[...]

    inv_hw = 1.0 / float(HW)
    wpw = wpw_ref[...]                               # (C, 3C)
    for g in range(G):
        r0 = g * C
        r1 = (g + 1) * C
        # Pool-first: spatial mean commutes with the linear 1x1 pointwise conv.
        m3 = jnp.sum(x3[r0:r1, :], axis=1, keepdims=True) * inv_hw      # (C, 1)
        m5 = jnp.sum(x5[r0:r1, :], axis=1, keepdims=True) * inv_hw
        m7 = jnp.sum(x7[r0:r1, :], axis=1, keepdims=True) * inv_hw
        pooled = (jnp.dot(wpw[:, 0:C], m3, preferred_element_type=jnp.float32)
                  + jnp.dot(wpw[:, C:2 * C], m5, preferred_element_type=jnp.float32)
                  + jnp.dot(wpw[:, 2 * C:3 * C], m7, preferred_element_type=jnp.float32)
                  + bpw_ref[...])                                        # (C, 1)
        h = (jnp.dot(wa1_ref[...], pooled, preferred_element_type=jnp.float32)
             + ba1_ref[...])                                             # (Cr, 1)
        sp = jnp.maximum(h, 0.0) + jnp.log(1.0 + jnp.exp(-jnp.abs(h)))   # stable softplus
        h = h * jnp.tanh(sp)                                             # Mish
        logits = (jnp.dot(wa2_ref[...], h, preferred_element_type=jnp.float32)
                  + ba2_ref[...])                                        # (3, 1)
        l0 = logits[0:1, 0:1]
        l1 = logits[1:2, 0:1]
        l2 = logits[2:3, 0:1]
        mx = jnp.maximum(jnp.maximum(l0, l1), l2)
        e0 = jnp.exp(l0 - mx)
        e1 = jnp.exp(l1 - mx)
        e2 = jnp.exp(l2 - mx)
        inv = 1.0 / (e0 + e1 + e2)
        wt0 = e0 * inv
        wt1 = e1 * inv
        wt2 = e2 * inv                                                   # (1, 1)
        out_ref[r0:r1, :] = (wt0 * x3[r0:r1, :] + wt1 * x5[r0:r1, :]
                             + wt2 * x7[r0:r1, :]).astype(out_ref.dtype)


def _make_pad_masks(H, W):
    """Masks that make flattened lane rolls equivalent to zero-padded shifts."""
    HW = H * W
    y = np.arange(HW) // W
    c = np.arange(HW) % W
    colpre = np.ones((7, HW), np.float32)    # applied to the SOURCE before roll
    rowpost = np.ones((7, HW), np.float32)   # applied to the OUTPUT after roll
    for d in range(-3, 4):
        if d > 0:
            colpre[d + 3] = (c >= d).astype(np.float32)
        elif d < 0:
            colpre[d + 3] = (c < W + d).astype(np.float32)
        rowpost[d + 3] = ((y + d >= 0) & (y + d < H)).astype(np.float32)
    return jnp.asarray(colpre), jnp.asarray(rowpost)


def _pick_group(B, C):
    """Images per grid step: fill the 8 sublanes for small C, keep blocks legal."""
    for g in range(B, 0, -1):
        if B % g == 0 and g * C <= 512 and (g == B or (g * C) % 8 == 0):
            return g
    return B


def msdc_forward(x, params):
    B, C, H, W = x.shape
    HW = H * W
    w3, b3, w5, b5, w7, b7, wpw, bpw, wa1, ba1, wa2, ba2 = params
    G = _pick_group(B, C)
    GC = G * C

    # Lane-dense activation layout; free metadata reshape (contiguous).
    x2d = x.reshape(B * C, HW)

    # Depthwise weights / biases pre-tiled to the G*C rows of one grid step.
    w3t = jnp.tile(w3.reshape(C, 9), (G, 1))
    w5t = jnp.tile(w5.reshape(C, 25), (G, 1))
    w7t = jnp.tile(w7.reshape(C, 49), (G, 1))
    b3t = jnp.tile(b3, (G, 1))
    b5t = jnp.tile(b5, (G, 1))
    b7t = jnp.tile(b7, (G, 1))

    colpre, rowpost = _make_pad_masks(H, W)

    weight_args = (w3t, b3t, w5t, b5t, w7t, b7t, wpw, bpw,
                   wa1, ba1, wa2, ba2, colpre, rowpost)

    def full_spec(a):
        nd = a.ndim
        return pl.BlockSpec(a.shape, lambda i, nd=nd: (0,) * nd)

    in_specs = ([pl.BlockSpec((GC, HW), lambda i: (i, 0))]
                + [full_spec(a) for a in weight_args])
    out_specs = pl.BlockSpec((GC, HW), lambda i: (i, 0))

    kernel = functools.partial(msdc_kernel, G=G, C=C, H=H, W=W)
    out2d = pl.pallas_call(
        kernel,
        out_shape=jax.ShapeDtypeStruct((B * C, HW), jnp.float32),
        grid_spec=pltpu.PrefetchScalarGridSpec(
            num_scalar_prefetch=0,
            grid=(B // G,),
            in_specs=in_specs,
            out_specs=out_specs),
        compiler_params=pltpu.CompilerParams(
            dimension_semantics=("parallel",)),
    )(x2d, *weight_args)
    return out2d.reshape(B, C, H, W)


def init_params(key, C):
    # Depthwise weights stored squeezed as (C, K, K), biases as (C, 1) columns.
    ks = jax.random.split(key, 12)
    s = 0.2
    w3 = s * jax.random.normal(ks[0], (C, 3, 3), jnp.float32)
    b3 = s * jax.random.normal(ks[1], (C, 1), jnp.float32)
    w5 = s * jax.random.normal(ks[2], (C, 5, 5), jnp.float32)
    b5 = s * jax.random.normal(ks[3], (C, 1), jnp.float32)
    w7 = s * jax.random.normal(ks[4], (C, 7, 7), jnp.float32)
    b7 = s * jax.random.normal(ks[5], (C, 1), jnp.float32)
    wpw = s * jax.random.normal(ks[6], (C, 3 * C), jnp.float32)      # (out, in)
    bpw = s * jax.random.normal(ks[7], (C, 1), jnp.float32)
    Cr = max(C // 4, 1)
    wa1 = s * jax.random.normal(ks[8], (Cr, C), jnp.float32)
    ba1 = s * jax.random.normal(ks[9], (Cr, 1), jnp.float32)
    wa2 = s * jax.random.normal(ks[10], (3, Cr), jnp.float32)
    ba2 = s * jax.random.normal(ks[11], (3, 1), jnp.float32)
    return (w3, b3, w5, b5, w7, b7, wpw, bpw, wa1, ba1, wa2, ba2)


def reference(x, params):
    """Pure-JAX (XLA) reference matching the PyTorch forward."""
    w3, b3, w5, b5, w7, b7, wpw, bpw, wa1, ba1, wa2, ba2 = params
    B, C, H, W = x.shape

    def dw(w, b, K):
        out = jax.lax.conv_general_dilated(
            x, w.reshape(C, 1, K, K), (1, 1), 'SAME',
            feature_group_count=C,
            dimension_numbers=('NCHW', 'OIHW', 'NCHW'))
        return out + b.reshape(1, C, 1, 1)

    x3, x5, x7 = dw(w3, b3, 3), dw(w5, b5, 5), dw(w7, b7, 7)
    cat = jnp.concatenate([x3, x5, x7], axis=1)                       # (B,3C,H,W)
    x_out = jnp.einsum('om,bmhw->bohw', wpw, cat) + bpw.reshape(1, C, 1, 1)
    pooled = x_out.mean(axis=(2, 3))                                  # (B, C)
    h1 = pooled @ wa1.T + ba1.reshape(1, -1)
    h1 = h1 * jnp.tanh(jax.nn.softplus(h1))                           # Mish
    logits = h1 @ wa2.T + ba2.reshape(1, -1)                          # (B, 3)
    wts = jax.nn.softmax(logits, axis=1)
    stack = jnp.stack([x3, x5, x7], axis=1)                           # (B,3,C,H,W)
    return (wts.reshape(B, 3, 1, 1, 1) * stack).sum(axis=1)


if __name__ == "__main__":
    key = jax.random.PRNGKey(0)
    kx, kp = jax.random.split(key)
    B, C, H, W = 2, 4, 16, 16
    x = jax.random.normal(kx, (B, C, H, W), jnp.float32)
    params = init_params(kp, C)

    out = jax.block_until_ready(msdc_forward(x, params))
    ref = jax.block_until_ready(reference(x, params))

    np.testing.assert_allclose(np.asarray(out), np.asarray(ref),
                               rtol=1e-4, atol=1e-4)
    print("KERNEL_OK")
</pallas_src>

<mosaic_0001>
module attributes {stable_mosaic.version = 11 : i64} {
  func.func @msdc_kernel(%arg0: i32, %arg1: memref<8x256xf32, #tpu.memory_space<vmem>>, %arg2: memref<8x9xf32, #tpu.memory_space<vmem>>, %arg3: memref<8x1xf32, #tpu.memory_space<vmem>>, %arg4: memref<8x25xf32, #tpu.memory_space<vmem>>, %arg5: memref<8x1xf32, #tpu.memory_space<vmem>>, %arg6: memref<8x49xf32, #tpu.memory_space<vmem>>, %arg7: memref<8x1xf32, #tpu.memory_space<vmem>>, %arg8: memref<4x12xf32, #tpu.memory_space<vmem>>, %arg9: memref<4x1xf32, #tpu.memory_space<vmem>>, %arg10: memref<1x4xf32, #tpu.memory_space<vmem>>, %arg11: memref<1x1xf32, #tpu.memory_space<vmem>>, %arg12: memref<3x1xf32, #tpu.memory_space<vmem>>, %arg13: memref<3x1xf32, #tpu.memory_space<vmem>>, %arg14: memref<7x256xf32, #tpu.memory_space<vmem>>, %arg15: memref<7x256xf32, #tpu.memory_space<vmem>>, %arg16: memref<8x256xf32, #tpu.memory_space<vmem>>) attributes {dimension_semantics = [#tpu.dimension_semantics<parallel>], iteration_bounds = array<i64: 1>, scalar_prefetch = 0 : i64, scratch_operands = 0 : i64, tpu.core_type = #tpu.core_type<tc>, window_params = [{transform_indices = @transform_0, window_bounds = array<i64: 8, 256>}, {pipeline_mode = #tpu.pipeline_mode<synchronous>, transform_indices = @transform_1, window_bounds = array<i64: 8, 9>}, {pipeline_mode = #tpu.pipeline_mode<synchronous>, transform_indices = @transform_2, window_bounds = array<i64: 8, 1>}, {pipeline_mode = #tpu.pipeline_mode<synchronous>, transform_indices = @transform_3, window_bounds = array<i64: 8, 25>}, {pipeline_mode = #tpu.pipeline_mode<synchronous>, transform_indices = @transform_4, window_bounds = array<i64: 8, 1>}, {pipeline_mode = #tpu.pipeline_mode<synchronous>, transform_indices = @transform_5, window_bounds = array<i64: 8, 49>}, {pipeline_mode = #tpu.pipeline_mode<synchronous>, transform_indices = @transform_6, window_bounds = array<i64: 8, 1>}, {pipeline_mode = #tpu.pipeline_mode<synchronous>, transform_indices = @transform_7, window_bounds = array<i64: 4, 12>}, {pipeline_mode = #tpu.pipeline_mode<synchronous>, transform_indices = @transform_8, window_bounds = array<i64: 4, 1>}, {pipeline_mode = #tpu.pipeline_mode<synchronous>, transform_indices = @transform_9, window_bounds = array<i64: 1, 4>}, {pipeline_mode = #tpu.pipeline_mode<synchronous>, transform_indices = @transform_10, window_bounds = array<i64: 1, 1>}, {pipeline_mode = #tpu.pipeline_mode<synchronous>, transform_indices = @transform_11, window_bounds = array<i64: 3, 1>}, {pipeline_mode = #tpu.pipeline_mode<synchronous>, transform_indices = @transform_12, window_bounds = array<i64: 3, 1>}, {pipeline_mode = #tpu.pipeline_mode<synchronous>, transform_indices = @transform_13, window_bounds = array<i64: 7, 256>}, {pipeline_mode = #tpu.pipeline_mode<synchronous>, transform_indices = @transform_14, window_bounds = array<i64: 7, 256>}, {transform_indices = @transform_15, window_bounds = array<i64: 8, 256>}]} {
    %c0 = arith.constant 0 : index
    %c0_0 = arith.constant 0 : index
    %0 = vector.load %arg1[%c0, %c0_0] : memref<8x256xf32, #tpu.memory_space<vmem>>, vector<8x256xf32>
    %c0_1 = arith.constant 0 : index
    %c0_2 = arith.constant 0 : index
    %1 = vector.load %arg2[%c0_1, %c0_2] : memref<8x9xf32, #tpu.memory_space<vmem>>, vector<8x9xf32>
    %c0_3 = arith.constant 0 : index
    %c0_4 = arith.constant 0 : index
    %2 = vector.load %arg4[%c0_3, %c0_4] : memref<8x25xf32, #tpu.memory_space<vmem>>, vector<8x25xf32>
    %c0_5 = arith.constant 0 : index
    %c0_6 = arith.constant 0 : index
    %3 = vector.load %arg6[%c0_5, %c0_6] : memref<8x49xf32, #tpu.memory_space<vmem>>, vector<8x49xf32>
    %c0_7 = arith.constant 0 : index
    %c0_8 = arith.constant 0 : index
    %4 = vector.load %arg14[%c0_7, %c0_8] : memref<7x256xf32, #tpu.memory_space<vmem>>, vector<1x256xf32>
    %5 = vector.broadcast %4 : vector<1x256xf32> to vector<8x256xf32>
    %6 = arith.mulf %0, %5 : vector<8x256xf32>
    %c1 = arith.constant 1 : index
    %c0_9 = arith.constant 0 : index
    %7 = vector.load %arg14[%c1, %c0_9] : memref<7x256xf32, #tpu.memory_space<vmem>>, vector<1x256xf32>
    %8 = vector.broadcast %7 : vector<1x256xf32> to vector<8x256xf32>
    %9 = arith.mulf %0, %8 : vector<8x256xf32>
    %c2 = arith.constant 2 : index
    %c0_10 = arith.constant 0 : index
    %10 = vector.load %arg14[%c2, %c0_10] : memref<7x256xf32, #tpu.memory_space<vmem>>, vector<1x256xf32>
    %11 = vector.broadcast %10 : vector<1x256xf32> to vector<8x256xf32>
    %12 = arith.mulf %0, %11 : vector<8x256xf32>
    %c4 = arith.constant 4 : index
    %c0_11 = arith.constant 0 : index
    %13 = vector.load %arg14[%c4, %c0_11] : memref<7x256xf32, #tpu.memory_space<vmem>>, vector<1x256xf32>
    %14 = vector.broadcast %13 : vector<1x256xf32> to vector<8x256xf32>
    %15 = arith.mulf %0, %14 : vector<8x256xf32>
    %c5 = arith.constant 5 : index
    %c0_12 = arith.constant 0 : index
    %16 = vector.load %arg14[%c5, %c0_12] : memref<7x256xf32, #tpu.memory_space<vmem>>, vector<1x256xf32>
    %17 = vector.broadcast %16 : vector<1x256xf32> to vector<8x256xf32>
    %18 = arith.mulf %0, %17 : vector<8x256xf32>
    %c6 = arith.constant 6 : index
    %c0_13 = arith.constant 0 : index
    %19 = vector.load %arg14[%c6, %c0_13] : memref<7x256xf32, #tpu.memory_space<vmem>>, vector<1x256xf32>
    %20 = vector.broadcast %19 : vector<1x256xf32> to vector<8x256xf32>
    %21 = arith.mulf %0, %20 : vector<8x256xf32>
    %cst = arith.constant 0.000000e+00 : f32
    %22 = vector.broadcast %cst : f32 to vector<8x256xf32>
    %cst_14 = arith.constant 0.000000e+00 : f32
    %23 = vector.broadcast %cst_14 : f32 to vector<8x256xf32>
    %cst_15 = arith.constant 0.000000e+00 : f32
    %24 = vector.broadcast %cst_15 : f32 to vector<8x256xf32>
    %cst_16 = arith.constant 0.000000e+00 : f32
    %25 = vector.broadcast %cst_16 : f32 to vector<8x256xf32>
    %c51_i32 = arith.constant 51 : i32
    %26 = tpu.dynamic_rotate %6 by %c51_i32 dim 1 : vector<8x256xf32>, i32 -> vector<8x256xf32>
    %27 = vector.extract_strided_slice %3 {offsets = [0, 0], sizes = [8, 1], strides = [1, 1]} : vector<8x49xf32> to vector<8x1xf32>
    %28 = vector.broadcast %27 : vector<8x1xf32> to vector<8x256xf32>
    %29 = arith.mulf %28, %26 : vector<8x256xf32>
    %30 = arith.addf %25, %29 : vector<8x256xf32>
    %c50_i32 = arith.constant 50 : i32
    %31 = tpu.dynamic_rotate %9 by %c50_i32 dim 1 : vector<8x256xf32>, i32 -> vector<8x256xf32>
    %32 = vector.extract_strided_slice %3 {offsets = [0, 1], sizes = [8, 1], strides = [1, 1]} : vector<8x49xf32> to vector<8x1xf32>
    %33 = vector.broadcast %32 : vector<8x1xf32> to vector<8x256xf32>
    %34 = arith.mulf %33, %31 : vector<8x256xf32>
    %35 = arith.addf %30, %34 : vector<8x256xf32>
    %c49_i32 = arith.constant 49 : i32
    %36 = tpu.dynamic_rotate %12 by %c49_i32 dim 1 : vector<8x256xf32>, i32 -> vector<8x256xf32>
    %37 = vector.extract_strided_slice %3 {offsets = [0, 2], sizes = [8, 1], strides = [1, 1]} : vector<8x49xf32> to vector<8x1xf32>
    %38 = vector.broadcast %37 : vector<8x1xf32> to vector<8x256xf32>
    %39 = arith.mulf %38, %36 : vector<8x256xf32>
    %40 = arith.addf %35, %39 : vector<8x256xf32>
    %c48_i32 = arith.constant 48 : i32
    %41 = tpu.dynamic_rotate %0 by %c48_i32 dim 1 : vector<8x256xf32>, i32 -> vector<8x256xf32>
    %42 = vector.extract_strided_slice %3 {offsets = [0, 3], sizes = [8, 1], strides = [1, 1]} : vector<8x49xf32> to vector<8x1xf32>
    %43 = vector.broadcast %42 : vector<8x1xf32> to vector<8x256xf32>
    %44 = arith.mulf %43, %41 : vector<8x256xf32>
    %45 = arith.addf %40, %44 : vector<8x256xf32>
    %c47_i32 = arith.constant 47 : i32
    %46 = tpu.dynamic_rotate %15 by %c47_i32 dim 1 : vector<8x256xf32>, i32 -> vector<8x256xf32>
    %47 = vector.extract_strided_slice %3 {offsets = [0, 4], sizes = [8, 1], strides = [1, 1]} : vector<8x49xf32> to vector<8x1xf32>
    %48 = vector.broadcast %47 : vector<8x1xf32> to vector<8x256xf32>
    %49 = arith.mulf %48, %46 : vector<8x256xf32>
    %50 = arith.addf %45, %49 : vector<8x256xf32>
    %c46_i32 = arith.constant 46 : i32
    %51 = tpu.dynamic_rotate %18 by %c46_i32 dim 1 : vector<8x256xf32>, i32 -> vector<8x256xf32>
    %52 = vector.extract_strided_slice %3 {offsets = [0, 5], sizes = [8, 1], strides = [1, 1]} : vector<8x49xf32> to vector<8x1xf32>
    %53 = vector.broadcast %52 : vector<8x1xf32> to vector<8x256xf32>
    %54 = arith.mulf %53, %51 : vector<8x256xf32>
    %55 = arith.addf %50, %54 : vector<8x256xf32>
    %c45_i32 = arith.constant 45 : i32
    %56 = tpu.dynamic_rotate %21 by %c45_i32 dim 1 : vector<8x256xf32>, i32 -> vector<8x256xf32>
    %57 = vector.extract_strided_slice %3 {offsets = [0, 6], sizes = [8, 1], strides = [1, 1]} : vector<8x49xf32> to vector<8x1xf32>
    %58 = vector.broadcast %57 : vector<8x1xf32> to vector<8x256xf32>
    %59 = arith.mulf %58, %56 : vector<8x256xf32>
    %60 = arith.addf %55, %59 : vector<8x256xf32>
    %c0_17 = arith.constant 0 : index
    %c0_18 = arith.constant 0 : index
    %61 = vector.load %arg15[%c0_17, %c0_18] : memref<7x256xf32, #tpu.memory_space<vmem>>, vector<1x256xf32>
    %62 = vector.broadcast %61 : vector<1x256xf32> to vector<8x256xf32>
    %63 = arith.mulf %62, %60 : vector<8x256xf32>
    %64 = arith.addf %24, %63 : vector<8x256xf32>
    %cst_19 = arith.constant 0.000000e+00 : f32
    %65 = vector.broadcast %cst_19 : f32 to vector<8x256xf32>
    %cst_20 = arith.constant 0.000000e+00 : f32
    %66 = vector.broadcast %cst_20 : f32 to vector<8x256xf32>
    %c35_i32 = arith.constant 35 : i32
    %67 = tpu.dynamic_rotate %6 by %c35_i32 dim 1 : vector<8x256xf32>, i32 -> vector<8x256xf32>
    %68 = vector.extract_strided_slice %3 {offsets = [0, 7], sizes = [8, 1], strides = [1, 1]} : vector<8x49xf32> to vector<8x1xf32>
    %69 = vector.broadcast %68 : vector<8x1xf32> to vector<8x256xf32>
    %70 = arith.mulf %69, %67 : vector<8x256xf32>
    %71 = arith.addf %65, %70 : vector<8x256xf32>
    %c34_i32 = arith.constant 34 : i32
    %72 = tpu.dynamic_rotate %9 by %c34_i32 dim 1 : vector<8x256xf32>, i32 -> vector<8x256xf32>
    %73 = vector.extract_strided_slice %3 {offsets = [0, 8], sizes = [8, 1], strides = [1, 1]} : vector<8x49xf32> to vector<8x1xf32>
    %74 = vector.broadcast %73 : vector<8x1xf32> to vector<8x256xf32>
    %75 = arith.mulf %74, %72 : vector<8x256xf32>
    %76 = arith.addf %71, %75 : vector<8x256xf32>
    %77 = vector.extract_strided_slice %2 {offsets = [0, 0], sizes = [8, 1], strides = [1, 1]} : vector<8x25xf32> to vector<8x1xf32>
    %78 = vector.broadcast %77 : vector<8x1xf32> to vector<8x256xf32>
    %79 = arith.mulf %78, %72 : vector<8x256xf32>
    %80 = arith.addf %66, %79 : vector<8x256xf32>
    %c33_i32 = arith.constant 33 : i32
    %81 = tpu.dynamic_rotate %12 by %c33_i32 dim 1 : vector<8x256xf32>, i32 -> vector<8x256xf32>
    %82 = vector.extract_strided_slice %3 {offsets = [0, 9], sizes = [8, 1], strides = [1, 1]} : vector<8x49xf32> to vector<8x1xf32>
    %83 = vector.broadcast %82 : vector<8x1xf32> to vector<8x256xf32>
    %84 = arith.mulf %83, %81 : vector<8x256xf32>
    %85 = arith.addf %76, %84 : vector<8x256xf32>
    %86 = vector.extract_strided_slice %2 {offsets = [0, 1], sizes = [8, 1], strides = [1, 1]} : vector<8x25xf32> to vector<8x1xf32>
    %87 = vector.broadcast %86 : vector<8x1xf32> to vector<8x256xf32>
    %88 = arith.mulf %87, %81 : vector<8x256xf32>
    %89 = arith.addf %80, %88 : vector<8x256xf32>
    %c32_i32 = arith.constant 32 : i32
    %90 = tpu.dynamic_rotate %0 by %c32_i32 dim 1 : vector<8x256xf32>, i32 -> vector<8x256xf32>
    %91 = vector.extract_strided_slice %3 {offsets = [0, 10], sizes = [8, 1], strides = [1, 1]} : vector<8x49xf32> to vector<8x1xf32>
    %92 = vector.broadcast %91 : vector<8x1xf32> to vector<8x256xf32>
    %93 = arith.mulf %92, %90 : vector<8x256xf32>
    %94 = arith.addf %85, %93 : vector<8x256xf32>
    %95 = vector.extract_strided_slice %2 {offsets = [0, 2], sizes = [8, 1], strides = [1, 1]} : vector<8x25xf32> to vector<8x1xf32>
    %96 = vector.broadcast %95 : vector<8x1xf32> to vector<8x256xf32>
    %97 = arith.mulf %96, %90 : vector<8x256xf32>
    %98 = arith.addf %89, %97 : vector<8x256xf32>
    %c31_i32 = arith.constant 31 : i32
    %99 = tpu.dynamic_rotate %15 by %c31_i32 dim 1 : vector<8x256xf32>, i32 -> vector<8x256xf32>
    %100 = vector.extract_strided_slice %3 {offsets = [0, 11], sizes = [8, 1], strides = [1, 1]} : vector<8x49xf32> to vector<8x1xf32>
    %101 = vector.broadcast %100 : vector<8x1xf32> to vector<8x256xf32>
    %102 = arith.mulf %101, %99 : vector<8x256xf32>
    %103 = arith.addf %94, %102 : vector<8x256xf32>
    %104 = vector.extract_strided_slice %2 {offsets = [0, 3], sizes = [8, 1], strides = [1, 1]} : vector<8x25xf32> to vector<8x1xf32>
    %105 = vector.broadcast %104 : vector<8x1xf32> to vector<8x256xf32>
    %106 = arith.mulf %105, %99 : vector<8x256xf32>
    %107 = arith.addf %98, %106 : vector<8x256xf32>
    %c30_i32 = arith.constant 30 : i32
    %108 = tpu.dynamic_rotate %18 by %c30_i32 dim 1 : vector<8x256xf32>, i32 -> vector<8x256xf32>
    %109 = vector.extract_strided_slice %3 {offsets = [0, 12], sizes = [8, 1], strides = [1, 1]} : vector<8x49xf32> to vector<8x1xf32>
    %110 = vector.broadcast %109 : vector<8x1xf32> to vector<8x256xf32>
    %111 = arith.mulf %110, %108 : vector<8x256xf32>
    %112 = arith.addf %103, %111 : vector<8x256xf32>
    %113 = vector.extract_strided_slice %2 {offsets = [0, 4], sizes = [8, 1], strides = [1, 1]} : vector<8x25xf32> to vector<8x1xf32>
    %114 = vector.broadcast %113 : vector<8x1xf32> to vector<8x256xf32>
    %115 = arith.mulf %114, %108 : vector<8x256xf32>
    %116 = arith.addf %107, %115 : vector<8x256xf32>
    %c29_i32 = arith.constant 29 : i32
    %117 = tpu.dynamic_rotate %21 by %c29_i32 dim 1 : vector<8x256xf32>, i32 -> vector<8x256xf32>
    %118 = vector.extract_strided_slice %3 {offsets = [0, 13], sizes = [8, 1], strides = [1, 1]} : vector<8x49xf32> to vector<8x1xf32>
    %119 = vector.broadcast %118 : vector<8x1xf32> to vector<8x256xf32>
    %120 = arith.mulf %119, %117 : vector<8x256xf32>
    %121 = arith.addf %112, %120 : vector<8x256xf32>
    %c1_21 = arith.constant 1 : index
    %c0_22 = arith.constant 0 : index
    %122 = vector.load %arg15[%c1_21, %c0_22] : memref<7x256xf32, #tpu.memory_space<vmem>>, vector<1x256xf32>
    %123 = vector.broadcast %122 : vector<1x256xf32> to vector<8x256xf32>
    %124 = arith.mulf %123, %121 : vector<8x256xf32>
    %125 = arith.addf %64, %124 : vector<8x256xf32>
    %126 = vector.broadcast %122 : vector<1x256xf32> to vector<8x256xf32>
    %127 = arith.mulf %126, %116 : vector<8x256xf32>
    %128 = arith.addf %23, %127 : vector<8x256xf32>
    %cst_23 = arith.constant 0.000000e+00 : f32
    %129 = vector.broadcast %cst_23 : f32 to vector<8x256xf32>
    %cst_24 = arith.constant 0.000000e+00 : f32
    %130 = vector.broadcast %cst_24 : f32 to vector<8x256xf32>
    %cst_25 = arith.constant 0.000000e+00 : f32
    %131 = vector.broadcast %cst_25 : f32 to vector<8x256xf32>
    %c19_i32 = arith.constant 19 : i32
    %132 = tpu.dynamic_rotate %6 by %c19_i32 dim 1 : vector<8x256xf32>, i32 -> vector<8x256xf32>
    %133 = vector.extract_strided_slice %3 {offsets = [0, 14], sizes = [8, 1], strides = [1, 1]} : vector<8x49xf32> to vector<8x1xf32>
    %134 = vector.broadcast %133 : vector<8x1xf32> to vector<8x256xf32>
    %135 = arith.mulf %134, %132 : vector<8x256xf32>
    %136 = arith.addf %129, %135 : vector<8x256xf32>
    %c18_i32 = arith.constant 18 : i32
    %137 = tpu.dynamic_rotate %9 by %c18_i32 dim 1 : vector<8x256xf32>, i32 -> vector<8x256xf32>
    %138 = vector.extract_strided_slice %3 {offsets = [0, 15], sizes = [8, 1], strides = [1, 1]} : vector<8x49xf32> to vector<8x1xf32>
    %139 = vector.broadcast %138 : vector<8x1xf32> to vector<8x256xf32>
    %140 = arith.mulf %139, %137 : vector<8x256xf32>
    %141 = arith.addf %136, %140 : vector<8x256xf32>
    %142 = vector.extract_strided_slice %2 {offsets = [0, 5], sizes = [8, 1], strides = [1, 1]} : vector<8x25xf32> to vector<8x1xf32>
    %143 = vector.broadcast %142 : vector<8x1xf32> to vector<8x256xf32>
    %144 = arith.mulf %143, %137 : vector<8x256xf32>
    %145 = arith.addf %130, %144 : vector<8x256xf32>
    %c17_i32 = arith.constant 17 : i32
    %146 = tpu.dynamic_rotate %12 by %c17_i32 dim 1 : vector<8x256xf32>, i32 -> vector<8x256xf32>
    %147 = vector.extract_strided_slice %3 {offsets = [0, 16], sizes = [8, 1], strides = [1, 1]} : vector<8x49xf32> to vector<8x1xf32>
    %148 = vector.broadcast %147 : vector<8x1xf32> to vector<8x256xf32>
    %149 = arith.mulf %148, %146 : vector<8x256xf32>
    %150 = arith.addf %141, %149 : vector<8x256xf32>
    %151 = vector.extract_strided_slice %2 {offsets = [0, 6], sizes = [8, 1], strides = [1, 1]} : vector<8x25xf32> to vector<8x1xf32>
    %152 = vector.broadcast %151 : vector<8x1xf32> to vector<8x256xf32>
    %153 = arith.mulf %152, %146 : vector<8x256xf32>
    %154 = arith.addf %145, %153 : vector<8x256xf32>
    %155 = vector.extract_strided_slice %1 {offsets = [0, 0], sizes = [8, 1], strides = [1, 1]} : vector<8x9xf32> to vector<8x1xf32>
    %156 = vector.broadcast %155 : vector<8x1xf32> to vector<8x256xf32>
    %157 = arith.mulf %156, %146 : vector<8x256xf32>
    %158 = arith.addf %131, %157 : vector<8x256xf32>
    %c16_i32 = arith.constant 16 : i32
    %159 = tpu.dynamic_rotate %0 by %c16_i32 dim 1 : vector<8x256xf32>, i32 -> vector<8x256xf32>
    %160 = vector.extract_strided_slice %3 {offsets = [0, 17], sizes = [8, 1], strides = [1, 1]} : vector<8x49xf32> to vector<8x1xf32>
    %161 = vector.broadcast %160 : vector<8x1xf32> to vector<8x256xf32>
    %162 = arith.mulf %161, %159 : vector<8x256xf32>
    %163 = arith.addf %150, %162 : vector<8x256xf32>
    %164 = vector.extract_strided_slice %2 {offsets = [0, 7], sizes = [8, 1], strides = [1, 1]} : vector<8x25xf32> to vector<8x1xf32>
    %165 = vector.broadcast %164 : vector<8x1xf32> to vector<8x256xf32>
    %166 = arith.mulf %165, %159 : vector<8x256xf32>
    %167 = arith.addf %154, %166 : vector<8x256xf32>
    %168 = vector.extract_strided_slice %1 {offsets = [0, 1], sizes = [8, 1], strides = [1, 1]} : vector<8x9xf32> to vector<8x1xf32>
    %169 = vector.broadcast %168 : vector<8x1xf32> to vector<8x256xf32>
    %170 = arith.mulf %169, %159 : vector<8x256xf32>
    %171 = arith.addf %158, %170 : vector<8x256xf32>
    %c15_i32 = arith.constant 15 : i32
    %172 = tpu.dynamic_rotate %15 by %c15_i32 dim 1 : vector<8x256xf32>, i32 -> vector<8x256xf32>
    %173 = vector.extract_strided_slice %3 {offsets = [0, 18], sizes = [8, 1], strides = [1, 1]} : vector<8x49xf32> to vector<8x1xf32>
    %174 = vector.broadcast %173 : vector<8x1xf32> to vector<8x256xf32>
    %175 = arith.mulf %174, %172 : vector<8x256xf32>
    %176 = arith.addf %163, %175 : vector<8x256xf32>
    %177 = vector.extract_strided_slice %2 {offsets = [0, 8], sizes = [8, 1], strides = [1, 1]} : vector<8x25xf32> to vector<8x1xf32>
    %178 = vector.broadcast %177 : vector<8x1xf32> to vector<8x256xf32>
    %179 = arith.mulf %178, %172 : vector<8x256xf32>
    %180 = arith.addf %167, %179 : vector<8x256xf32>
    %181 = vector.extract_strided_slice %1 {offsets = [0, 2], sizes = [8, 1], strides = [1, 1]} : vector<8x9xf32> to vector<8x1xf32>
    %182 = vector.broadcast %181 : vector<8x1xf32> to vector<8x256xf32>
    %183 = arith.mulf %182, %172 : vector<8x256xf32>
    %184 = arith.addf %171, %183 : vector<8x256xf32>
    %c14_i32 = arith.constant 14 : i32
    %185 = tpu.dynamic_rotate %18 by %c14_i32 dim 1 : vector<8x256xf32>, i32 -> vector<8x256xf32>
    %186 = vector.extract_strided_slice %3 {offsets = [0, 19], sizes = [8, 1], strides = [1, 1]} : vector<8x49xf32> to vector<8x1xf32>
    %187 = vector.broadcast %186 : vector<8x1xf32> to vector<8x256xf32>
    %188 = arith.mulf %187, %185 : vector<8x256xf32>
    %189 = arith.addf %176, %188 : vector<8x256xf32>
    %190 = vector.extract_strided_slice %2 {offsets = [0, 9], sizes = [8, 1], strides = [1, 1]} : vector<8x25xf32> to vector<8x1xf32>
    %191 = vector.broadcast %190 : vector<8x1xf32> to vector<8x256xf32>
    %192 = arith.mulf %191, %185 : vector<8x256xf32>
    %193 = arith.addf %180, %192 : vector<8x256xf32>
    %c13_i32 = arith.constant 13 : i32
    %194 = tpu.dynamic_rotate %21 by %c13_i32 dim 1 : vector<8x256xf32>, i32 -> vector<8x256xf32>
    %195 = vector.extract_strided_slice %3 {offsets = [0, 20], sizes = [8, 1], strides = [1, 1]} : vector<8x49xf32> to vector<8x1xf32>
    %196 = vector.broadcast %195 : vector<8x1xf32> to vector<8x256xf32>
    %197 = arith.mulf %196, %194 : vector<8x256xf32>
    %198 = arith.addf %189, %197 : vector<8x256xf32>
    %c2_26 = arith.constant 2 : index
    %c0_27 = arith.constant 0 : index
    %199 = vector.load %arg15[%c2_26, %c0_27] : memref<7x256xf32, #tpu.memory_space<vmem>>, vector<1x256xf32>
    %200 = vector.broadcast %199 : vector<1x256xf32> to vector<8x256xf32>
    %201 = arith.mulf %200, %198 : vector<8x256xf32>
    %202 = arith.addf %125, %201 : vector<8x256xf32>
    %203 = vector.broadcast %199 : vector<1x256xf32> to vector<8x256xf32>
    %204 = arith.mulf %203, %193 : vector<8x256xf32>
    %205 = arith.addf %128, %204 : vector<8x256xf32>
    %206 = vector.broadcast %199 : vector<1x256xf32> to vector<8x256xf32>
    %207 = arith.mulf %206, %184 : vector<8x256xf32>
    %208 = arith.addf %22, %207 : vector<8x256xf32>
    %cst_28 = arith.constant 0.000000e+00 : f32
    %209 = vector.broadcast %cst_28 : f32 to vector<8x256xf32>
    %cst_29 = arith.constant 0.000000e+00 : f32
    %210 = vector.broadcast %cst_29 : f32 to vector<8x256xf32>
    %cst_30 = arith.constant 0.000000e+00 : f32
    %211 = vector.broadcast %cst_30 : f32 to vector<8x256xf32>
    %c3_i32 = arith.constant 3 : i32
    %212 = tpu.dynamic_rotate %6 by %c3_i32 dim 1 : vector<8x256xf32>, i32 -> vector<8x256xf32>
    %213 = vector.extract_strided_slice %3 {offsets = [0, 21], sizes = [8, 1], strides = [1, 1]} : vector<8x49xf32> to vector<8x1xf32>
    %214 = vector.broadcast %213 : vector<8x1xf32> to vector<8x256xf32>
    %215 = arith.mulf %214, %212 : vector<8x256xf32>
    %216 = arith.addf %209, %215 : vector<8x256xf32>
    %c2_i32 = arith.constant 2 : i32
    %217 = tpu.dynamic_rotate %9 by %c2_i32 dim 1 : vector<8x256xf32>, i32 -> vector<8x256xf32>
    %218 = vector.extract_strided_slice %3 {offsets = [0, 22], sizes = [8, 1], strides = [1, 1]} : vector<8x49xf32> to vector<8x1xf32>
    %219 = vector.broadcast %218 : vector<8x1xf32> to vector<8x256xf32>
    %220 = arith.mulf %219, %217 : vector<8x256xf32>
    %221 = arith.addf %216, %220 : vector<8x256xf32>
    %222 = vector.extract_strided_slice %2 {offsets = [0, 10], sizes = [8, 1], strides = [1, 1]} : vector<8x25xf32> to vector<8x1xf32>
    %223 = vector.broadcast %222 : vector<8x1xf32> to vector<8x256xf32>
    %224 = arith.mulf %223, %217 : vector<8x256xf32>
    %225 = arith.addf %210, %224 : vector<8x256xf32>
    %c1_i32 = arith.constant 1 : i32
    %226 = tpu.dynamic_rotate %12 by %c1_i32 dim 1 : vector<8x256xf32>, i32 -> vector<8x256xf32>
    %227 = vector.extract_strided_slice %3 {offsets = [0, 23], sizes = [8, 1], strides = [1, 1]} : vector<8x49xf32> to vector<8x1xf32>
    %228 = vector.broadcast %227 : vector<8x1xf32> to vector<8x256xf32>
    %229 = arith.mulf %228, %226 : vector<8x256xf32>
    %230 = arith.addf %221, %229 : vector<8x256xf32>
    %231 = vector.extract_strided_slice %2 {offsets = [0, 11], sizes = [8, 1], strides = [1, 1]} : vector<8x25xf32> to vector<8x1xf32>
    %232 = vector.broadcast %231 : vector<8x1xf32> to vector<8x256xf32>
    %233 = arith.mulf %232, %226 : vector<8x256xf32>
    %234 = arith.addf %225, %233 : vector<8x256xf32>
    %235 = vector.extract_strided_slice %1 {offsets = [0, 3], sizes = [8, 1], strides = [1, 1]} : vector<8x9xf32> to vector<8x1xf32>
    %236 = vector.broadcast %235 : vector<8x1xf32> to vector<8x256xf32>
    %237 = arith.mulf %236, %226 : vector<8x256xf32>
    %238 = arith.addf %211, %237 : vector<8x256xf32>
    %239 = vector.extract_strided_slice %3 {offsets = [0, 24], sizes = [8, 1], strides = [1, 1]} : vector<8x49xf32> to vector<8x1xf32>
    %240 = vector.broadcast %239 : vector<8x1xf32> to vector<8x256xf32>
    %241 = arith.mulf %240, %0 : vector<8x256xf32>
    %242 = arith.addf %230, %241 : vector<8x256xf32>
    %243 = vector.extract_strided_slice %2 {offsets = [0, 12], sizes = [8, 1], strides = [1, 1]} : vector<8x25xf32> to vector<8x1xf32>
    %244 = vector.broadcast %243 : vector<8x1xf32> to vector<8x256xf32>
    %245 = arith.mulf %244, %0 : vector<8x256xf32>
    %246 = arith.addf %234, %245 : vector<8x256xf32>
    %247 = vector.extract_strided_slice %1 {offsets = [0, 4], sizes = [8, 1], strides = [1, 1]} : vector<8x9xf32> to vector<8x1xf32>
    %248 = vector.broadcast %247 : vector<8x1xf32> to vector<8x256xf32>
    %249 = arith.mulf %248, %0 : vector<8x256xf32>
    %250 = arith.addf %238, %249 : vector<8x256xf32>
    %c255_i32 = arith.constant 255 : i32
    %251 = tpu.dynamic_rotate %15 by %c255_i32 dim 1 : vector<8x256xf32>, i32 -> vector<8x256xf32>
    %252 = vector.extract_strided_slice %3 {offsets = [0, 25], sizes = [8, 1], strides = [1, 1]} : vector<8x49xf32> to vector<8x1xf32>
    %253 = vector.broadcast %252 : vector<8x1xf32> to vector<8x256xf32>
    %254 = arith.mulf %253, %251 : vector<8x256xf32>
    %255 = arith.addf %242, %254 : vector<8x256xf32>
    %256 = vector.extract_strided_slice %2 {offsets = [0, 13], sizes = [8, 1], strides = [1, 1]} : vector<8x25xf32> to vector<8x1xf32>
    %257 = vector.broadcast %256 : vector<8x1xf32> to vector<8x256xf32>
    %258 = arith.mulf %257, %251 : vector<8x256xf32>
    %259 = arith.addf %246, %258 : vector<8x256xf32>
    %260 = vector.extract_strided_slice %1 {offsets = [0, 5], sizes = [8, 1], strides = [1, 1]} : vector<8x9xf32> to vector<8x1xf32>
    %261 = vector.broadcast %260 : vector<8x1xf32> to vector<8x256xf32>
    %262 = arith.mulf %261, %251 : vector<8x256xf32>
    %263 = arith.addf %250, %262 : vector<8x256xf32>
    %c254_i32 = arith.constant 254 : i32
    %264 = tpu.dynamic_rotate %18 by %c254_i32 dim 1 : vector<8x256xf32>, i32 -> vector<8x256xf32>
    %265 = vector.extract_strided_slice %3 {offsets = [0, 26], sizes = [8, 1], strides = [1, 1]} : vector<8x49xf32> to vector<8x1xf32>
    %266 = vector.broadcast %265 : vector<8x1xf32> to vector<8x256xf32>
    %267 = arith.mulf %266, %264 : vector<8x256xf32>
    %268 = arith.addf %255, %267 : vector<8x256xf32>
    %269 = vector.extract_strided_slice %2 {offsets = [0, 14], sizes = [8, 1], strides = [1, 1]} : vector<8x25xf32> to vector<8x1xf32>
    %270 = vector.broadcast %269 : vector<8x1xf32> to vector<8x256xf32>
    %271 = arith.mulf %270, %264 : vector<8x256xf32>
    %272 = arith.addf %259, %271 : vector<8x256xf32>
    %c253_i32 = arith.constant 253 : i32
    %273 = tpu.dynamic_rotate %21 by %c253_i32 dim 1 : vector<8x256xf32>, i32 -> vector<8x256xf32>
    %274 = vector.extract_strided_slice %3 {offsets = [0, 27], sizes = [8, 1], strides = [1, 1]} : vector<8x49xf32> to vector<8x1xf32>
    %275 = vector.broadcast %274 : vector<8x1xf32> to vector<8x256xf32>
    %276 = arith.mulf %275, %273 : vector<8x256xf32>
    %277 = arith.addf %268, %276 : vector<8x256xf32>
    %c3 = arith.constant 3 : index
    %c0_31 = arith.constant 0 : index
    %278 = vector.load %arg15[%c3, %c0_31] : memref<7x256xf32, #tpu.memory_space<vmem>>, vector<1x256xf32>
    %279 = vector.broadcast %278 : vector<1x256xf32> to vector<8x256xf32>
    %280 = arith.mulf %279, %277 : vector<8x256xf32>
    %281 = arith.addf %202, %280 : vector<8x256xf32>
    %282 = vector.broadcast %278 : vector<1x256xf32> to vector<8x256xf32>
    %283 = arith.mulf %282, %272 : vector<8x256xf32>
    %284 = arith.addf %205, %283 : vector<8x256xf32>
    %285 = vector.broadcast %278 : vector<1x256xf32> to vector<8x256xf32>
    %286 = arith.mulf %285, %263 : vector<8x256xf32>
    %287 = arith.addf %208, %286 : vector<8x256xf32>
    %cst_32 = arith.constant 0.000000e+00 : f32
    %288 = vector.broadcast %cst_32 : f32 to vector<8x256xf32>
    %cst_33 = arith.constant 0.000000e+00 : f32
    %289 = vector.broadcast %cst_33 : f32 to vector<8x256xf32>
    %cst_34 = arith.constant 0.000000e+00 : f32
    %290 = vector.broadcast %cst_34 : f32 to vector<8x256xf32>
    %c243_i32 = arith.constant 243 : i32
    %291 = tpu.dynamic_rotate %6 by %c243_i32 dim 1 : vector<8x256xf32>, i32 -> vector<8x256xf32>
    %292 = vector.extract_strided_slice %3 {offsets = [0, 28], sizes = [8, 1], strides = [1, 1]} : vector<8x49xf32> to vector<8x1xf32>
    %293 = vector.broadcast %292 : vector<8x1xf32> to vector<8x256xf32>
    %294 = arith.mulf %293, %291 : vector<8x256xf32>
    %295 = arith.addf %288, %294 : vector<8x256xf32>
    %c242_i32 = arith.constant 242 : i32
    %296 = tpu.dynamic_rotate %9 by %c242_i32 dim 1 : vector<8x256xf32>, i32 -> vector<8x256xf32>
    %297 = vector.extract_strided_slice %3 {offsets = [0, 29], sizes = [8, 1], strides = [1, 1]} : vector<8x49xf32> to vector<8x1xf32>
    %298 = vector.broadcast %297 : vector<8x1xf32> to vector<8x256xf32>
    %299 = arith.mulf %298, %296 : vector<8x256xf32>
    %300 = arith.addf %295, %299 : vector<8x256xf32>
    %301 = vector.extract_strided_slice %2 {offsets = [0, 15], sizes = [8, 1], strides = [1, 1]} : vector<8x25xf32> to vector<8x1xf32>
    %302 = vector.broadcast %301 : vector<8x1xf32> to vector<8x256xf32>
    %303 = arith.mulf %302, %296 : vector<8x256xf32>
    %304 = arith.addf %289, %303 : vector<8x256xf32>
    %c241_i32 = arith.constant 241 : i32
    %305 = tpu.dynamic_rotate %12 by %c241_i32 dim 1 : vector<8x256xf32>, i32 -> vector<8x256xf32>
    %306 = vector.extract_strided_slice %3 {offsets = [0, 30], sizes = [8, 1], strides = [1, 1]} : vector<8x49xf32> to vector<8x1xf32>
    %307 = vector.broadcast %306 : vector<8x1xf32> to vector<8x256xf32>
    %308 = arith.mulf %307, %305 : vector<8x256xf32>
    %309 = arith.addf %300, %308 : vector<8x256xf32>
    %310 = vector.extract_strided_slice %2 {offsets = [0, 16], sizes = [8, 1], strides = [1, 1]} : vector<8x25xf32> to vector<8x1xf32>
    %311 = vector.broadcast %310 : vector<8x1xf32> to vector<8x256xf32>
    %312 = arith.mulf %311, %305 : vector<8x256xf32>
    %313 = arith.addf %304, %312 : vector<8x256xf32>
    %314 = vector.extract_strided_slice %1 {offsets = [0, 6], sizes = [8, 1], strides = [1, 1]} : vector<8x9xf32> to vector<8x1xf32>
    %315 = vector.broadcast %314 : vector<8x1xf32> to vector<8x256xf32>
    %316 = arith.mulf %315, %305 : vector<8x256xf32>
    %317 = arith.addf %290, %316 : vector<8x256xf32>
    %c240_i32 = arith.constant 240 : i32
    %318 = tpu.dynamic_rotate %0 by %c240_i32 dim 1 : vector<8x256xf32>, i32 -> vector<8x256xf32>
    %319 = vector.extract_strided_slice %3 {offsets = [0, 31], sizes = [8, 1], strides = [1, 1]} : vector<8x49xf32> to vector<8x1xf32>
    %320 = vector.broadcast %319 : vector<8x1xf32> to vector<8x256xf32>
    %321 = arith.mulf %320, %318 : vector<8x256xf32>
    %322 = arith.addf %309, %321 : vector<8x256xf32>
    %323 = vector.extract_strided_slice %2 {offsets = [0, 17], sizes = [8, 1], strides = [1, 1]} : vector<8x25xf32> to vector<8x1xf32>
    %324 = vector.broadcast %323 : vector<8x1xf32> to vector<8x256xf32>
    %325 = arith.mulf %324, %318 : vector<8x256xf32>
    %326 = arith.addf %313, %325 : vector<8x256xf32>
    %327 = vector.extract_strided_slice %1 {offsets = [0, 7], sizes = [8, 1], strides = [1, 1]} : vector<8x9xf32> to vector<8x1xf32>
    %328 = vector.broadcast %327 : vector<8x1xf32> to vector<8x256xf32>
    %329 = arith.mulf %328, %318 : vector<8x256xf32>
    %330 = arith.addf %317, %329 : vector<8x256xf32>
    %c239_i32 = arith.constant 239 : i32
    %331 = tpu.dynamic_rotate %15 by %c239_i32 dim 1 : vector<8x256xf32>, i32 -> vector<8x256xf32>
    %332 = vector.extract_strided_slice %3 {offsets = [0, 32], sizes = [8, 1], strides = [1, 1]} : vector<8x49xf32> to vector<8x1xf32>
    %333 = vector.broadcast %332 : vector<8x1xf32> to vector<8x256xf32>
    %334 = arith.mulf %333, %331 : vector<8x256xf32>
    %335 = arith.addf %322, %334 : vector<8x256xf32>
    %336 = vector.extract_strided_slice %2 {offsets = [0, 18], sizes = [8, 1], strides = [1, 1]} : vector<8x25xf32> to vector<8x1xf32>
    %337 = vector.broadcast %336 : vector<8x1xf32> to vector<8x256xf32>
    %338 = arith.mulf %337, %331 : vector<8x256xf32>
    %339 = arith.addf %326, %338 : vector<8x256xf32>
    %340 = vector.extract_strided_slice %1 {offsets = [0, 8], sizes = [8, 1], strides = [1, 1]} : vector<8x9xf32> to vector<8x1xf32>
    %341 = vector.broadcast %340 : vector<8x1xf32> to vector<8x256xf32>
    %342 = arith.mulf %341, %331 : vector<8x256xf32>
    %343 = arith.addf %330, %342 : vector<8x256xf32>
    %c238_i32 = arith.constant 238 : i32
    %344 = tpu.dynamic_rotate %18 by %c238_i32 dim 1 : vector<8x256xf32>, i32 -> vector<8x256xf32>
    %345 = vector.extract_strided_slice %3 {offsets = [0, 33], sizes = [8, 1], strides = [1, 1]} : vector<8x49xf32> to vector<8x1xf32>
    %346 = vector.broadcast %345 : vector<8x1xf32> to vector<8x256xf32>
    %347 = arith.mulf %346, %344 : vector<8x256xf32>
    %348 = arith.addf %335, %347 : vector<8x256xf32>
    %349 = vector.extract_strided_slice %2 {offsets = [0, 19], sizes = [8, 1], strides = [1, 1]} : vector<8x25xf32> to vector<8x1xf32>
    %350 = vector.broadcast %349 : vector<8x1xf32> to vector<8x256xf32>
    %351 = arith.mulf %350, %344 : vector<8x256xf32>
    %352 = arith.addf %339, %351 : vector<8x256xf32>
    %c237_i32 = arith.constant 237 : i32
    %353 = tpu.dynamic_rotate %21 by %c237_i32 dim 1 : vector<8x256xf32>, i32 -> vector<8x256xf32>
    %354 = vector.extract_strided_slice %3 {offsets = [0, 34], sizes = [8, 1], strides = [1, 1]} : vector<8x49xf32> to vector<8x1xf32>
    %355 = vector.broadcast %354 : vector<8x1xf32> to vector<8x256xf32>
    %356 = arith.mulf %355, %353 : vector<8x256xf32>
    %357 = arith.addf %348, %356 : vector<8x256xf32>
    %c4_35 = arith.constant 4 : index
    %c0_36 = arith.constant 0 : index
    %358 = vector.load %arg15[%c4_35, %c0_36] : memref<7x256xf32, #tpu.memory_space<vmem>>, vector<1x256xf32>
    %359 = vector.broadcast %358 : vector<1x256xf32> to vector<8x256xf32>
    %360 = arith.mulf %359, %357 : vector<8x256xf32>
    %361 = arith.addf %281, %360 : vector<8x256xf32>
    %362 = vector.broadcast %358 : vector<1x256xf32> to vector<8x256xf32>
    %363 = arith.mulf %362, %352 : vector<8x256xf32>
    %364 = arith.addf %284, %363 : vector<8x256xf32>
    %365 = vector.broadcast %358 : vector<1x256xf32> to vector<8x256xf32>
    %366 = arith.mulf %365, %343 : vector<8x256xf32>
    %367 = arith.addf %287, %366 : vector<8x256xf32>
    %cst_37 = arith.constant 0.000000e+00 : f32
    %368 = vector.broadcast %cst_37 : f32 to vector<8x256xf32>
    %cst_38 = arith.constant 0.000000e+00 : f32
    %369 = vector.broadcast %cst_38 : f32 to vector<8x256xf32>
    %c227_i32 = arith.constant 227 : i32
    %370 = tpu.dynamic_rotate %6 by %c227_i32 dim 1 : vector<8x256xf32>, i32 -> vector<8x256xf32>
    %371 = vector.extract_strided_slice %3 {offsets = [0, 35], sizes = [8, 1], strides = [1, 1]} : vector<8x49xf32> to vector<8x1xf32>
    %372 = vector.broadcast %371 : vector<8x1xf32> to vector<8x256xf32>
    %373 = arith.mulf %372, %370 : vector<8x256xf32>
    %374 = arith.addf %368, %373 : vector<8x256xf32>
    %c226_i32 = arith.constant 226 : i32
    %375 = tpu.dynamic_rotate %9 by %c226_i32 dim 1 : vector<8x256xf32>, i32 -> vector<8x256xf32>
    %376 = vector.extract_strided_slice %3 {offsets = [0, 36], sizes = [8, 1], strides = [1, 1]} : vector<8x49xf32> to vector<8x1xf32>
    %377 = vector.broadcast %376 : vector<8x1xf32> to vector<8x256xf32>
    %378 = arith.mulf %377, %375 : vector<8x256xf32>
    %379 = arith.addf %374, %378 : vector<8x256xf32>
    %380 = vector.extract_strided_slice %2 {offsets = [0, 20], sizes = [8, 1], strides = [1, 1]} : vector<8x25xf32> to vector<8x1xf32>
    %381 = vector.broadcast %380 : vector<8x1xf32> to vector<8x256xf32>
    %382 = arith.mulf %381, %375 : vector<8x256xf32>
    %383 = arith.addf %369, %382 : vector<8x256xf32>
    %c225_i32 = arith.constant 225 : i32
    %384 = tpu.dynamic_rotate %12 by %c225_i32 dim 1 : vector<8x256xf32>, i32 -> vector<8x256xf32>
    %385 = vector.extract_strided_slice %3 {offsets = [0, 37], sizes = [8, 1], strides = [1, 1]} : vector<8x49xf32> to vector<8x1xf32>
    %386 = vector.broadcast %385 : vector<8x1xf32> to vector<8x256xf32>
    %387 = arith.mulf %386, %384 : vector<8x256xf32>
    %388 = arith.addf %379, %387 : vector<8x256xf32>
    %389 = vector.extract_strided_slice %2 {offsets = [0, 21], sizes = [8, 1], strides = [1, 1]} : vector<8x25xf32> to vector<8x1xf32>
    %390 = vector.broadcast %389 : vector<8x1xf32> to vector<8x256xf32>
    %391 = arith.mulf %390, %384 : vector<8x256xf32>
    %392 = arith.addf %383, %391 : vector<8x256xf32>
    %c224_i32 = arith.constant 224 : i32
    %393 = tpu.dynamic_rotate %0 by %c224_i32 dim 1 : vector<8x256xf32>, i32 -> vector<8x256xf32>
    %394 = vector.extract_strided_slice %3 {offsets = [0, 38], sizes = [8, 1], strides = [1, 1]} : vector<8x49xf32> to vector<8x1xf32>
    %395 = vector.broadcast %394 : vector<8x1xf32> to vector<8x256xf32>
    %396 = arith.mulf %395, %393 : vector<8x256xf32>
    %397 = arith.addf %388, %396 : vector<8x256xf32>
    %398 = vector.extract_strided_slice %2 {offsets = [0, 22], sizes = [8, 1], strides = [1, 1]} : vector<8x25xf32> to vector<8x1xf32>
    %399 = vector.broadcast %398 : vector<8x1xf32> to vector<8x256xf32>
    %400 = arith.mulf %399, %393 : vector<8x256xf32>
    %401 = arith.addf %392, %400 : vector<8x256xf32>
    %c223_i32 = arith.constant 223 : i32
    %402 = tpu.dynamic_rotate %15 by %c223_i32 dim 1 : vector<8x256xf32>, i32 -> vector<8x256xf32>
    %403 = vector.extract_strided_slice %3 {offsets = [0, 39], sizes = [8, 1], strides = [1, 1]} : vector<8x49xf32> to vector<8x1xf32>
    %404 = vector.broadcast %403 : vector<8x1xf32> to vector<8x256xf32>
    %405 = arith.mulf %404, %402 : vector<8x256xf32>
    %406 = arith.addf %397, %405 : vector<8x256xf32>
    %407 = vector.extract_strided_slice %2 {offsets = [0, 23], sizes = [8, 1], strides = [1, 1]} : vector<8x25xf32> to vector<8x1xf32>
    %408 = vector.broadcast %407 : vector<8x1xf32> to vector<8x256xf32>
    %409 = arith.mulf %408, %402 : vector<8x256xf32>
    %410 = arith.addf %401, %409 : vector<8x256xf32>
    %c222_i32 = arith.constant 222 : i32
    %411 = tpu.dynamic_rotate %18 by %c222_i32 dim 1 : vector<8x256xf32>, i32 -> vector<8x256xf32>
    %412 = vector.extract_strided_slice %3 {offsets = [0, 40], sizes = [8, 1], strides = [1, 1]} : vector<8x49xf32> to vector<8x1xf32>
    %413 = vector.broadcast %412 : vector<8x1xf32> to vector<8x256xf32>
    %414 = arith.mulf %413, %411 : vector<8x256xf32>
    %415 = arith.addf %406, %414 : vector<8x256xf32>
    %416 = vector.extract_strided_slice %2 {offsets = [0, 24], sizes = [8, 1], strides = [1, 1]} : vector<8x25xf32> to vector<8x1xf32>
    %417 = vector.broadcast %416 : vector<8x1xf32> to vector<8x256xf32>
    %418 = arith.mulf %417, %411 : vector<8x256xf32>
    %419 = arith.addf %410, %418 : vector<8x256xf32>
    %c221_i32 = arith.constant 221 : i32
    %420 = tpu.dynamic_rotate %21 by %c221_i32 dim 1 : vector<8x256xf32>, i32 -> vector<8x256xf32>
    %421 = vector.extract_strided_slice %3 {offsets = [0, 41], sizes = [8, 1], strides = [1, 1]} : vector<8x49xf32> to vector<8x1xf32>
    %422 = vector.broadcast %421 : vector<8x1xf32> to vector<8x256xf32>
    %423 = arith.mulf %422, %420 : vector<8x256xf32>
    %424 = arith.addf %415, %423 : vector<8x256xf32>
    %c5_39 = arith.constant 5 : index
    %c0_40 = arith.constant 0 : index
    %425 = vector.load %arg15[%c5_39, %c0_40] : memref<7x256xf32, #tpu.memory_space<vmem>>, vector<1x256xf32>
    %426 = vector.broadcast %425 : vector<1x256xf32> to vector<8x256xf32>
    %427 = arith.mulf %426, %424 : vector<8x256xf32>
    %428 = arith.addf %361, %427 : vector<8x256xf32>
    %429 = vector.broadcast %425 : vector<1x256xf32> to vector<8x256xf32>
    %430 = arith.mulf %429, %419 : vector<8x256xf32>
    %431 = arith.addf %364, %430 : vector<8x256xf32>
    %cst_41 = arith.constant 0.000000e+00 : f32
    %432 = vector.broadcast %cst_41 : f32 to vector<8x256xf32>
    %c211_i32 = arith.constant 211 : i32
    %433 = tpu.dynamic_rotate %6 by %c211_i32 dim 1 : vector<8x256xf32>, i32 -> vector<8x256xf32>
    %434 = vector.extract_strided_slice %3 {offsets = [0, 42], sizes = [8, 1], strides = [1, 1]} : vector<8x49xf32> to vector<8x1xf32>
    %435 = vector.broadcast %434 : vector<8x1xf32> to vector<8x256xf32>
    %436 = arith.mulf %435, %433 : vector<8x256xf32>
    %437 = arith.addf %432, %436 : vector<8x256xf32>
    %c210_i32 = arith.constant 210 : i32
    %438 = tpu.dynamic_rotate %9 by %c210_i32 dim 1 : vector<8x256xf32>, i32 -> vector<8x256xf32>
    %439 = vector.extract_strided_slice %3 {offsets = [0, 43], sizes = [8, 1], strides = [1, 1]} : vector<8x49xf32> to vector<8x1xf32>
    %440 = vector.broadcast %439 : vector<8x1xf32> to vector<8x256xf32>
    %441 = arith.mulf %440, %438 : vector<8x256xf32>
    %442 = arith.addf %437, %441 : vector<8x256xf32>
    %c209_i32 = arith.constant 209 : i32
    %443 = tpu.dynamic_rotate %12 by %c209_i32 dim 1 : vector<8x256xf32>, i32 -> vector<8x256xf32>
    %444 = vector.extract_strided_slice %3 {offsets = [0, 44], sizes = [8, 1], strides = [1, 1]} : vector<8x49xf32> to vector<8x1xf32>
    %445 = vector.broadcast %444 : vector<8x1xf32> to vector<8x256xf32>
    %446 = arith.mulf %445, %443 : vector<8x256xf32>
    %447 = arith.addf %442, %446 : vector<8x256xf32>
    %c208_i32 = arith.constant 208 : i32
    %448 = tpu.dynamic_rotate %0 by %c208_i32 dim 1 : vector<8x256xf32>, i32 -> vector<8x256xf32>
    %449 = vector.extract_strided_slice %3 {offsets = [0, 45], sizes = [8, 1], strides = [1, 1]} : vector<8x49xf32> to vector<8x1xf32>
    %450 = vector.broadcast %449 : vector<8x1xf32> to vector<8x256xf32>
    %451 = arith.mulf %450, %448 : vector<8x256xf32>
    %452 = arith.addf %447, %451 : vector<8x256xf32>
    %c207_i32 = arith.constant 207 : i32
    %453 = tpu.dynamic_rotate %15 by %c207_i32 dim 1 : vector<8x256xf32>, i32 -> vector<8x256xf32>
    %454 = vector.extract_strided_slice %3 {offsets = [0, 46], sizes = [8, 1], strides = [1, 1]} : vector<8x49xf32> to vector<8x1xf32>
    %455 = vector.broadcast %454 : vector<8x1xf32> to vector<8x256xf32>
    %456 = arith.mulf %455, %453 : vector<8x256xf32>
    %457 = arith.addf %452, %456 : vector<8x256xf32>
    %c206_i32 = arith.constant 206 : i32
    %458 = tpu.dynamic_rotate %18 by %c206_i32 dim 1 : vector<8x256xf32>, i32 -> vector<8x256xf32>
    %459 = vector.extract_strided_slice %3 {offsets = [0, 47], sizes = [8, 1], strides = [1, 1]} : vector<8x49xf32> to vector<8x1xf32>
    %460 = vector.broadcast %459 : vector<8x1xf32> to vector<8x256xf32>
    %461 = arith.mulf %460, %458 : vector<8x256xf32>
    %462 = arith.addf %457, %461 : vector<8x256xf32>
    %c205_i32 = arith.constant 205 : i32
    %463 = tpu.dynamic_rotate %21 by %c205_i32 dim 1 : vector<8x256xf32>, i32 -> vector<8x256xf32>
    %464 = vector.extract_strided_slice %3 {offsets = [0, 48], sizes = [8, 1], strides = [1, 1]} : vector<8x49xf32> to vector<8x1xf32>
    %465 = vector.broadcast %464 : vector<8x1xf32> to vector<8x256xf32>
    %466 = arith.mulf %465, %463 : vector<8x256xf32>
    %467 = arith.addf %462, %466 : vector<8x256xf32>
    %c6_42 = arith.constant 6 : index
    %c0_43 = arith.constant 0 : index
    %468 = vector.load %arg15[%c6_42, %c0_43] : memref<7x256xf32, #tpu.memory_space<vmem>>, vector<1x256xf32>
    %469 = vector.broadcast %468 : vector<1x256xf32> to vector<8x256xf32>
    %470 = arith.mulf %469, %467 : vector<8x256xf32>
    %471 = arith.addf %428, %470 : vector<8x256xf32>
    %c0_44 = arith.constant 0 : index
    %c0_45 = arith.constant 0 : index
    %472 = vector.load %arg3[%c0_44, %c0_45] : memref<8x1xf32, #tpu.memory_space<vmem>>, vector<8x1xf32>
    %473 = vector.broadcast %472 : vector<8x1xf32> to vector<8x256xf32>
    %474 = arith.addf %367, %473 : vector<8x256xf32>
    %c0_46 = arith.constant 0 : index
    %c0_47 = arith.constant 0 : index
    %475 = vector.load %arg5[%c0_46, %c0_47] : memref<8x1xf32, #tpu.memory_space<vmem>>, vector<8x1xf32>
    %476 = vector.broadcast %475 : vector<8x1xf32> to vector<8x256xf32>
    %477 = arith.addf %431, %476 : vector<8x256xf32>
    %c0_48 = arith.constant 0 : index
    %c0_49 = arith.constant 0 : index
    %478 = vector.load %arg7[%c0_48, %c0_49] : memref<8x1xf32, #tpu.memory_space<vmem>>, vector<8x1xf32>
    %479 = vector.broadcast %478 : vector<8x1xf32> to vector<8x256xf32>
    %480 = arith.addf %471, %479 : vector<8x256xf32>
    %c0_50 = arith.constant 0 : index
    %c0_51 = arith.constant 0 : index
    %481 = vector.load %arg8[%c0_50, %c0_51] : memref<4x12xf32, #tpu.memory_space<vmem>>, vector<4x12xf32>
    %482 = vector.extract_strided_slice %474 {offsets = [0, 0], sizes = [4, 256], strides = [1, 1]} : vector<8x256xf32> to vector<4x256xf32>
    %cst_52 = arith.constant dense<0.000000e+00> : vector<4xf32>
    %483 = vector.multi_reduction <add>, %482, %cst_52 [1] : vector<4x256xf32> to vector<4xf32>
    %484 = vector.shape_cast %483 : vector<4xf32> to vector<4x1xf32>
    %cst_53 = arith.constant 3.906250e-03 : f32
    %485 = vector.broadcast %cst_53 : f32 to vector<4x1xf32>
    %486 = arith.mulf %484, %485 : vector<4x1xf32>
    %487 = vector.extract_strided_slice %477 {offsets = [0, 0], sizes = [4, 256], strides = [1, 1]} : vector<8x256xf32> to vector<4x256xf32>
    %cst_54 = arith.constant dense<0.000000e+00> : vector<4xf32>
    %488 = vector.multi_reduction <add>, %487, %cst_54 [1] : vector<4x256xf32> to vector<4xf32>
    %489 = vector.shape_cast %488 : vector<4xf32> to vector<4x1xf32>
    %cst_55 = arith.constant 3.906250e-03 : f32
    %490 = vector.broadcast %cst_55 : f32 to vector<4x1xf32>
    %491 = arith.mulf %489, %490 : vector<4x1xf32>
    %492 = vector.extract_strided_slice %480 {offsets = [0, 0], sizes = [4, 256], strides = [1, 1]} : vector<8x256xf32> to vector<4x256xf32>
    %cst_56 = arith.constant dense<0.000000e+00> : vector<4xf32>
    %493 = vector.multi_reduction <add>, %492, %cst_56 [1] : vector<4x256xf32> to vector<4xf32>
    %494 = vector.shape_cast %493 : vector<4xf32> to vector<4x1xf32>
    %cst_57 = arith.constant 3.906250e-03 : f32
    %495 = vector.broadcast %cst_57 : f32 to vector<4x1xf32>
    %496 = arith.mulf %494, %495 : vector<4x1xf32>
    %497 = vector.extract_strided_slice %481 {offsets = [0, 0], sizes = [4, 4], strides = [1, 1]} : vector<4x12xf32> to vector<4x4xf32>
    %cst_58 = arith.constant dense<0.000000e+00> : vector<4x1xf32>
    %498 = tpu.matmul %497, %486, %cst_58 {dimension_numbers = #tpu.dot_dimension_numbers<[1], [0], [0], [1], [0, 0, 1, 1], [], []>} : vector<4x4xf32>, vector<4x1xf32>, vector<4x1xf32> -> vector<4x1xf32>
    %499 = vector.extract_strided_slice %481 {offsets = [0, 4], sizes = [4, 4], strides = [1, 1]} : vector<4x12xf32> to vector<4x4xf32>
    %cst_59 = arith.constant dense<0.000000e+00> : vector<4x1xf32>
    %500 = tpu.matmul %499, %491, %cst_59 {dimension_numbers = #tpu.dot_dimension_numbers<[1], [0], [0], [1], [0, 0, 1, 1], [], []>} : vector<4x4xf32>, vector<4x1xf32>, vector<4x1xf32> -> vector<4x1xf32>
    %501 = arith.addf %498, %500 : vector<4x1xf32>
    %502 = vector.extract_strided_slice %481 {offsets = [0, 8], sizes = [4, 4], strides = [1, 1]} : vector<4x12xf32> to vector<4x4xf32>
    %cst_60 = arith.constant dense<0.000000e+00> : vector<4x1xf32>
    %503 = tpu.matmul %502, %496, %cst_60 {dimension_numbers = #tpu.dot_dimension_numbers<[1], [0], [0], [1], [0, 0, 1, 1], [], []>} : vector<4x4xf32>, vector<4x1xf32>, vector<4x1xf32> -> vector<4x1xf32>
    %504 = arith.addf %501, %503 : vector<4x1xf32>
    %c0_61 = arith.constant 0 : index
    %c0_62 = arith.constant 0 : index
    %505 = vector.load %arg9[%c0_61, %c0_62] : memref<4x1xf32, #tpu.memory_space<vmem>>, vector<4x1xf32>
    %506 = arith.addf %504, %505 : vector<4x1xf32>
    %c0_63 = arith.constant 0 : index
    %c0_64 = arith.constant 0 : index
    %507 = vector.load %arg10[%c0_63, %c0_64] : memref<1x4xf32, #tpu.memory_space<vmem>>, vector<1x4xf32>
    %cst_65 = arith.constant dense<0.000000e+00> : vector<1x1xf32>
    %508 = tpu.matmul %507, %506, %cst_65 {dimension_numbers = #tpu.dot_dimension_numbers<[1], [0], [0], [1], [0, 0, 1, 1], [], []>} : vector<1x4xf32>, vector<4x1xf32>, vector<1x1xf32> -> vector<1x1xf32>
    %c0_66 = arith.constant 0 : index
    %c0_67 = arith.constant 0 : index
    %509 = vector.load %arg11[%c0_66, %c0_67] : memref<1x1xf32, #tpu.memory_space<vmem>>, vector<1x1xf32>
    %510 = arith.addf %508, %509 : vector<1x1xf32>
    %cst_68 = arith.constant 0.000000e+00 : f32
    %511 = vector.broadcast %cst_68 : f32 to vector<1x1xf32>
    %512 = arith.maximumf %510, %511 : vector<1x1xf32>
    %513 = math.absf %510 : vector<1x1xf32>
    %cst_69 = arith.constant 0.000000e+00 : f32
    %514 = vector.broadcast %cst_69 : f32 to vector<1x1xf32>
    %515 = arith.subf %514, %513 : vector<1x1xf32>
    %516 = math.exp %515 : vector<1x1xf32>
    %cst_70 = arith.constant 1.000000e+00 : f32
    %517 = vector.broadcast %cst_70 : f32 to vector<1x1xf32>
    %518 = arith.addf %517, %516 : vector<1x1xf32>
    %519 = math.log %518 : vector<1x1xf32>
    %520 = arith.addf %512, %519 : vector<1x1xf32>
    %521 = math.tanh %520 : vector<1x1xf32>
    %522 = arith.mulf %510, %521 : vector<1x1xf32>
    %c0_71 = arith.constant 0 : index
    %c0_72 = arith.constant 0 : index
    %523 = vector.load %arg12[%c0_71, %c0_72] : memref<3x1xf32, #tpu.memory_space<vmem>>, vector<3x1xf32>
    %cst_73 = arith.constant dense<0.000000e+00> : vector<3x1xf32>
    %524 = tpu.matmul %523, %522, %cst_73 {dimension_numbers = #tpu.dot_dimension_numbers<[1], [0], [0], [1], [0, 0, 1, 1], [], []>} : vector<3x1xf32>, vector<1x1xf32>, vector<3x1xf32> -> vector<3x1xf32>
    %c0_74 = arith.constant 0 : index
    %c0_75 = arith.constant 0 : index
    %525 = vector.load %arg13[%c0_74, %c0_75] : memref<3x1xf32, #tpu.memory_space<vmem>>, vector<3x1xf32>
    %526 = arith.addf %524, %525 : vector<3x1xf32>
    %527 = vector.extract_strided_slice %526 {offsets = [0, 0], sizes = [1, 1], strides = [1, 1]} : vector<3x1xf32> to vector<1x1xf32>
    %528 = vector.extract_strided_slice %526 {offsets = [1, 0], sizes = [1, 1], strides = [1, 1]} : vector<3x1xf32> to vector<1x1xf32>
    %529 = vector.extract_strided_slice %526 {offsets = [2, 0], sizes = [1, 1], strides = [1, 1]} : vector<3x1xf32> to vector<1x1xf32>
    %530 = arith.maximumf %527, %528 : vector<1x1xf32>
    %531 = arith.maximumf %530, %529 : vector<1x1xf32>
    %532 = arith.subf %527, %531 : vector<1x1xf32>
    %533 = math.exp %532 : vector<1x1xf32>
    %534 = arith.subf %528, %531 : vector<1x1xf32>
    %535 = math.exp %534 : vector<1x1xf32>
    %536 = arith.subf %529, %531 : vector<1x1xf32>
    %537 = math.exp %536 : vector<1x1xf32>
    %538 = arith.addf %533, %535 : vector<1x1xf32>
    %539 = arith.addf %538, %537 : vector<1x1xf32>
    %cst_76 = arith.constant 1.000000e+00 : f32
    %540 = vector.broadcast %cst_76 : f32 to vector<1x1xf32>
    %541 = arith.divf %540, %539 : vector<1x1xf32>
    %542 = arith.mulf %533, %541 : vector<1x1xf32>
    %543 = arith.mulf %535, %541 : vector<1x1xf32>
    %544 = arith.mulf %537, %541 : vector<1x1xf32>
    %545 = vector.extract_strided_slice %474 {offsets = [0, 0], sizes = [4, 256], strides = [1, 1]} : vector<8x256xf32> to vector<4x256xf32>
    %546 = vector.broadcast %542 : vector<1x1xf32> to vector<4x256xf32>
    %547 = arith.mulf %546, %545 : vector<4x256xf32>
    %548 = vector.extract_strided_slice %477 {offsets = [0, 0], sizes = [4, 256], strides = [1, 1]} : vector<8x256xf32> to vector<4x256xf32>
    %549 = vector.broadcast %543 : vector<1x1xf32> to vector<4x256xf32>
    %550 = arith.mulf %549, %548 : vector<4x256xf32>
    %551 = arith.addf %547, %550 : vector<4x256xf32>
    %552 = vector.extract_strided_slice %480 {offsets = [0, 0], sizes = [4, 256], strides = [1, 1]} : vector<8x256xf32> to vector<4x256xf32>
    %553 = vector.broadcast %544 : vector<1x1xf32> to vector<4x256xf32>
    %554 = arith.mulf %553, %552 : vector<4x256xf32>
    %555 = arith.addf %551, %554 : vector<4x256xf32>
    %c0_77 = arith.constant 0 : index
    %c0_78 = arith.constant 0 : index
    %556 = vector.load %arg16[%c0_77, %c0_78] : memref<8x256xf32, #tpu.memory_space<vmem>>, vector<4x256xf32>
    tpu.vector_store %arg16[%c0_77, %c0_78], %555 {strides = array<i32>} : memref<8x256xf32, #tpu.memory_space<vmem>>, vector<4x256xf32>,
    %557 = vector.extract_strided_slice %474 {offsets = [4, 0], sizes = [4, 256], strides = [1, 1]} : vector<8x256xf32> to vector<4x256xf32>
    %cst_79 = arith.constant dense<0.000000e+00> : vector<4xf32>
    %558 = vector.multi_reduction <add>, %557, %cst_79 [1] : vector<4x256xf32> to vector<4xf32>
    %559 = vector.shape_cast %558 : vector<4xf32> to vector<4x1xf32>
    %cst_80 = arith.constant 3.906250e-03 : f32
    %560 = vector.broadcast %cst_80 : f32 to vector<4x1xf32>
    %561 = arith.mulf %559, %560 : vector<4x1xf32>
    %562 = vector.extract_strided_slice %477 {offsets = [4, 0], sizes = [4, 256], strides = [1, 1]} : vector<8x256xf32> to vector<4x256xf32>
    %cst_81 = arith.constant dense<0.000000e+00> : vector<4xf32>
    %563 = vector.multi_reduction <add>, %562, %cst_81 [1] : vector<4x256xf32> to vector<4xf32>
    %564 = vector.shape_cast %563 : vector<4xf32> to vector<4x1xf32>
    %cst_82 = arith.constant 3.906250e-03 : f32
    %565 = vector.broadcast %cst_82 : f32 to vector<4x1xf32>
    %566 = arith.mulf %564, %565 : vector<4x1xf32>
    %567 = vector.extract_strided_slice %480 {offsets = [4, 0], sizes = [4, 256], strides = [1, 1]} : vector<8x256xf32> to vector<4x256xf32>
    %cst_83 = arith.constant dense<0.000000e+00> : vector<4xf32>
    %568 = vector.multi_reduction <add>, %567, %cst_83 [1] : vector<4x256xf32> to vector<4xf32>
    %569 = vector.shape_cast %568 : vector<4xf32> to vector<4x1xf32>
    %cst_84 = arith.constant 3.906250e-03 : f32
    %570 = vector.broadcast %cst_84 : f32 to vector<4x1xf32>
    %571 = arith.mulf %569, %570 : vector<4x1xf32>
    %572 = vector.extract_strided_slice %481 {offsets = [0, 0], sizes = [4, 4], strides = [1, 1]} : vector<4x12xf32> to vector<4x4xf32>
    %cst_85 = arith.constant dense<0.000000e+00> : vector<4x1xf32>
    %573 = tpu.matmul %572, %561, %cst_85 {dimension_numbers = #tpu.dot_dimension_numbers<[1], [0], [0], [1], [0, 0, 1, 1], [], []>} : vector<4x4xf32>, vector<4x1xf32>, vector<4x1xf32> -> vector<4x1xf32>
    %574 = vector.extract_strided_slice %481 {offsets = [0, 4], sizes = [4, 4], strides = [1, 1]} : vector<4x12xf32> to vector<4x4xf32>
    %cst_86 = arith.constant dense<0.000000e+00> : vector<4x1xf32>
    %575 = tpu.matmul %574, %566, %cst_86 {dimension_numbers = #tpu.dot_dimension_numbers<[1], [0], [0], [1], [0, 0, 1, 1], [], []>} : vector<4x4xf32>, vector<4x1xf32>, vector<4x1xf32> -> vector<4x1xf32>
    %576 = arith.addf %573, %575 : vector<4x1xf32>
    %577 = vector.extract_strided_slice %481 {offsets = [0, 8], sizes = [4, 4], strides = [1, 1]} : vector<4x12xf32> to vector<4x4xf32>
    %cst_87 = arith.constant dense<0.000000e+00> : vector<4x1xf32>
    %578 = tpu.matmul %577, %571, %cst_87 {dimension_numbers = #tpu.dot_dimension_numbers<[1], [0], [0], [1], [0, 0, 1, 1], [], []>} : vector<4x4xf32>, vector<4x1xf32>, vector<4x1xf32> -> vector<4x1xf32>
    %579 = arith.addf %576, %578 : vector<4x1xf32>
    %c0_88 = arith.constant 0 : index
    %c0_89 = arith.constant 0 : index
    %580 = vector.load %arg9[%c0_88, %c0_89] : memref<4x1xf32, #tpu.memory_space<vmem>>, vector<4x1xf32>
    %581 = arith.addf %579, %580 : vector<4x1xf32>
    %c0_90 = arith.constant 0 : index
    %c0_91 = arith.constant 0 : index
    %582 = vector.load %arg10[%c0_90, %c0_91] : memref<1x4xf32, #tpu.memory_space<vmem>>, vector<1x4xf32>
    %cst_92 = arith.constant dense<0.000000e+00> : vector<1x1xf32>
    %583 = tpu.matmul %582, %581, %cst_92 {dimension_numbers = #tpu.dot_dimension_numbers<[1], [0], [0], [1], [0, 0, 1, 1], [], []>} : vector<1x4xf32>, vector<4x1xf32>, vector<1x1xf32> -> vector<1x1xf32>
    %c0_93 = arith.constant 0 : index
    %c0_94 = arith.constant 0 : index
    %584 = vector.load %arg11[%c0_93, %c0_94] : memref<1x1xf32, #tpu.memory_space<vmem>>, vector<1x1xf32>
    %585 = arith.addf %583, %584 : vector<1x1xf32>
    %cst_95 = arith.constant 0.000000e+00 : f32
    %586 = vector.broadcast %cst_95 : f32 to vector<1x1xf32>
    %587 = arith.maximumf %585, %586 : vector<1x1xf32>
    %588 = math.absf %585 : vector<1x1xf32>
    %cst_96 = arith.constant 0.000000e+00 : f32
    %589 = vector.broadcast %cst_96 : f32 to vector<1x1xf32>
    %590 = arith.subf %589, %588 : vector<1x1xf32>
    %591 = math.exp %590 : vector<1x1xf32>
    %cst_97 = arith.constant 1.000000e+00 : f32
    %592 = vector.broadcast %cst_97 : f32 to vector<1x1xf32>
    %593 = arith.addf %592, %591 : vector<1x1xf32>
    %594 = math.log %593 : vector<1x1xf32>
    %595 = arith.addf %587, %594 : vector<1x1xf32>
    %596 = math.tanh %595 : vector<1x1xf32>
    %597 = arith.mulf %585, %596 : vector<1x1xf32>
    %c0_98 = arith.constant 0 : index
    %c0_99 = arith.constant 0 : index
    %598 = vector.load %arg12[%c0_98, %c0_99] : memref<3x1xf32, #tpu.memory_space<vmem>>, vector<3x1xf32>
    %cst_100 = arith.constant dense<0.000000e+00> : vector<3x1xf32>
    %599 = tpu.matmul %598, %597, %cst_100 {dimension_numbers = #tpu.dot_dimension_numbers<[1], [0], [0], [1], [0, 0, 1, 1], [], []>} : vector<3x1xf32>, vector<1x1xf32>, vector<3x1xf32> -> vector<3x1xf32>
    %c0_101 = arith.constant 0 : index
    %c0_102 = arith.constant 0 : index
    %600 = vector.load %arg13[%c0_101, %c0_102] : memref<3x1xf32, #tpu.memory_space<vmem>>, vector<3x1xf32>
    %601 = arith.addf %599, %600 : vector<3x1xf32>
    %602 = vector.extract_strided_slice %601 {offsets = [0, 0], sizes = [1, 1], strides = [1, 1]} : vector<3x1xf32> to vector<1x1xf32>
    %603 = vector.extract_strided_slice %601 {offsets = [1, 0], sizes = [1, 1], strides = [1, 1]} : vector<3x1xf32> to vector<1x1xf32>
    %604 = vector.extract_strided_slice %601 {offsets = [2, 0], sizes = [1, 1], strides = [1, 1]} : vector<3x1xf32> to vector<1x1xf32>
    %605 = arith.maximumf %602, %603 : vector<1x1xf32>
    %606 = arith.maximumf %605, %604 : vector<1x1xf32>
    %607 = arith.subf %602, %606 : vector<1x1xf32>
    %608 = math.exp %607 : vector<1x1xf32>
    %609 = arith.subf %603, %606 : vector<1x1xf32>
    %610 = math.exp %609 : vector<1x1xf32>
    %611 = arith.subf %604, %606 : vector<1x1xf32>
    %612 = math.exp %611 : vector<1x1xf32>
    %613 = arith.addf %608, %610 : vector<1x1xf32>
    %614 = arith.addf %613, %612 : vector<1x1xf32>
    %cst_103 = arith.constant 1.000000e+00 : f32
    %615 = vector.broadcast %cst_103 : f32 to vector<1x1xf32>
    %616 = arith.divf %615, %614 : vector<1x1xf32>
    %617 = arith.mulf %608, %616 : vector<1x1xf32>
    %618 = arith.mulf %610, %616 : vector<1x1xf32>
    %619 = arith.mulf %612, %616 : vector<1x1xf32>
    %620 = vector.extract_strided_slice %474 {offsets = [4, 0], sizes = [4, 256], strides = [1, 1]} : vector<8x256xf32> to vector<4x256xf32>
    %621 = vector.broadcast %617 : vector<1x1xf32> to vector<4x256xf32>
    %622 = arith.mulf %621, %620 : vector<4x256xf32>
    %623 = vector.extract_strided_slice %477 {offsets = [4, 0], sizes = [4, 256], strides = [1, 1]} : vector<8x256xf32> to vector<4x256xf32>
    %624 = vector.broadcast %618 : vector<1x1xf32> to vector<4x256xf32>
    %625 = arith.mulf %624, %623 : vector<4x256xf32>
    %626 = arith.addf %622, %625 : vector<4x256xf32>
    %627 = vector.extract_strided_slice %480 {offsets = [4, 0], sizes = [4, 256], strides = [1, 1]} : vector<8x256xf32> to vector<4x256xf32>
    %628 = vector.broadcast %619 : vector<1x1xf32> to vector<4x256xf32>
    %629 = arith.mulf %628, %627 : vector<4x256xf32>
    %630 = arith.addf %626, %629 : vector<4x256xf32>
    %c4_104 = arith.constant 4 : index
    %c0_105 = arith.constant 0 : index
    %631 = vector.load %arg16[%c4_104, %c0_105] : memref<8x256xf32, #tpu.memory_space<vmem>>, vector<4x256xf32>
    tpu.vector_store %arg16[%c4_104, %c0_105], %630 {strides = array<i32>} : memref<8x256xf32, #tpu.memory_space<vmem>>, vector<4x256xf32>,
    return
  }
  func.func @transform_0(%arg0: i32) -> (i32, i32) {
    %c0_i32 = arith.constant 0 : i32
    %c0_i32_0 = arith.constant 0 : i32
    return %arg0, %c0_i32 : i32, i32
  }
  func.func @transform_1(%arg0: i32) -> (i32, i32) {
    %c0_i32 = arith.constant 0 : i32
    %c0_i32_0 = arith.constant 0 : i32
    %c0_i32_1 = arith.constant 0 : i32
    return %c0_i32, %c0_i32_0 : i32, i32
  }
  func.func @transform_2(%arg0: i32) -> (i32, i32) {
    %c0_i32 = arith.constant 0 : i32
    %c0_i32_0 = arith.constant 0 : i32
    %c0_i32_1 = arith.constant 0 : i32
    return %c0_i32, %c0_i32_0 : i32, i32
  }
  func.func @transform_3(%arg0: i32) -> (i32, i32) {
    %c0_i32 = arith.constant 0 : i32
    %c0_i32_0 = arith.constant 0 : i32
    %c0_i32_1 = arith.constant 0 : i32
    return %c0_i32, %c0_i32_0 : i32, i32
  }
  func.func @transform_4(%arg0: i32) -> (i32, i32) {
    %c0_i32 = arith.constant 0 : i32
    %c0_i32_0 = arith.constant 0 : i32
    %c0_i32_1 = arith.constant 0 : i32
    return %c0_i32, %c0_i32_0 : i32, i32
  }
  func.func @transform_5(%arg0: i32) -> (i32, i32) {
    %c0_i32 = arith.constant 0 : i32
    %c0_i32_0 = arith.constant 0 : i32
    %c0_i32_1 = arith.constant 0 : i32
    return %c0_i32, %c0_i32_0 : i32, i32
  }
  func.func @transform_6(%arg0: i32) -> (i32, i32) {
    %c0_i32 = arith.constant 0 : i32
    %c0_i32_0 = arith.constant 0 : i32
    %c0_i32_1 = arith.constant 0 : i32
    return %c0_i32, %c0_i32_0 : i32, i32
  }
  func.func @transform_7(%arg0: i32) -> (i32, i32) {
    %c0_i32 = arith.constant 0 : i32
    %c0_i32_0 = arith.constant 0 : i32
    %c0_i32_1 = arith.constant 0 : i32
    return %c0_i32, %c0_i32_0 : i32, i32
  }
  func.func @transform_8(%arg0: i32) -> (i32, i32) {
    %c0_i32 = arith.constant 0 : i32
    %c0_i32_0 = arith.constant 0 : i32
    %c0_i32_1 = arith.constant 0 : i32
    return %c0_i32, %c0_i32_0 : i32, i32
  }
  func.func @transform_9(%arg0: i32) -> (i32, i32) {
    %c0_i32 = arith.constant 0 : i32
    %c0_i32_0 = arith.constant 0 : i32
    %c0_i32_1 = arith.constant 0 : i32
    return %c0_i32, %c0_i32_0 : i32, i32
  }
  func.func @transform_10(%arg0: i32) -> (i32, i32) {
    %c0_i32 = arith.constant 0 : i32
    %c0_i32_0 = arith.constant 0 : i32
    %c0_i32_1 = arith.constant 0 : i32
    return %c0_i32, %c0_i32_0 : i32, i32
  }
  func.func @transform_11(%arg0: i32) -> (i32, i32) {
    %c0_i32 = arith.constant 0 : i32
    %c0_i32_0 = arith.constant 0 : i32
    %c0_i32_1 = arith.constant 0 : i32
    return %c0_i32, %c0_i32_0 : i32, i32
  }
  func.func @transform_12(%arg0: i32) -> (i32, i32) {
    %c0_i32 = arith.constant 0 : i32
    %c0_i32_0 = arith.constant 0 : i32
    %c0_i32_1 = arith.constant 0 : i32
    return %c0_i32, %c0_i32_0 : i32, i32
  }
  func.func @transform_13(%arg0: i32) -> (i32, i32) {
    %c0_i32 = arith.constant 0 : i32
    %c0_i32_0 = arith.constant 0 : i32
    %c0_i32_1 = arith.constant 0 : i32
    return %c0_i32, %c0_i32_0 : i32, i32
  }
  func.func @transform_14(%arg0: i32) -> (i32, i32) {
    %c0_i32 = arith.constant 0 : i32
    %c0_i32_0 = arith.constant 0 : i32
    %c0_i32_1 = arith.constant 0 : i32
    return %c0_i32, %c0_i32_0 : i32, i32
  }
  func.func @transform_15(%arg0: i32) -> (i32, i32) {
    %c0_i32 = arith.constant 0 : i32
    %c0_i32_0 = arith.constant 0 : i32
    return %arg0, %c0_i32 : i32, i32
  }
}

</mosaic_0001>

<llo_original>
// kernel: tpu_custom_call.1
$region0: #{tpu_custom_call.1}
  #allocation0 [shape = 'u32[]', space=smem, size = 0x4, offset = 0x4, fixed_abs, tag = 'smem constant byte address 0x4 - core index']
  #allocation1 [shape = 'u32[72,128]{1,0:T(1,128)}', space=vmem, size = 0x9000, scoped, tag = 'internal scratch']
  #allocation2 [shape = 'f32[1,1]{1,0:T(1,128)S(1)}', space=vmem, size = 0x200, scoped, tag = 'scoped memory for tpu_custom_call.1']
  %s0 = inlined_call_operand.vmem [shape: f32[8,256], index: 0, kind: input, shape index: {}]
  %s1 = inlined_call_operand.vmem [shape: f32[8,9], index: 1, kind: input, shape index: {}]
  %s2 = inlined_call_operand.vmem [shape: f32[8,1], index: 2, kind: input, shape index: {}]
  %s3 = inlined_call_operand.hbm [shape: f32[8,25], index: 3, kind: input, shape index: {}]
  %s4 = inlined_call_operand.vmem [shape: f32[8,1], index: 4, kind: input, shape index: {}]
  %s5 = inlined_call_operand.hbm [shape: f32[8,49], index: 5, kind: input, shape index: {}]
  %s6 = inlined_call_operand.vmem [shape: f32[8,1], index: 6, kind: input, shape index: {}]
  %s7 = inlined_call_operand.vmem [shape: f32[4,12], index: 7, kind: input, shape index: {}]
  %s8 = inlined_call_operand.vmem [shape: f32[4,1], index: 8, kind: input, shape index: {}]
  %s9 = inlined_call_operand.vmem [shape: f32[1,4], index: 9, kind: input, shape index: {}]
  %s10 = inlined_call_operand.<no memory space> [shape: f32[1,1], index: 10, kind: input, shape index: {}]
  %s11 = inlined_call_operand.vmem [shape: f32[3,1], index: 11, kind: input, shape index: {}]
  %s12 = inlined_call_operand.vmem [shape: f32[3,1], index: 12, kind: input, shape index: {}]
  %s13 = inlined_call_operand.hbm [shape: f32[7,256], index: 13, kind: input, shape index: {}]
  %s14 = inlined_call_operand.hbm [shape: f32[7,256], index: 14, kind: input, shape index: {}]
  %s15 = inlined_call_operand.hbm [shape: f32[8,256], index: 15, kind: output, shape index: {}]
  %s16 = sld [smem:[#allocation0]]
  $region86: #{tpu_custom_call.1} parent=0
    _
  %s18 = ssub.s32 1, %s16
  %s19 = scalar_select 0, %s18, %s16
  %v20 = vstv %s10
  %21 = vst [vmem:[#allocation2] sm:$0x1] %v20
  $region1: #{tpu_custom_call.1} parent=0
    #allocation3 [shape = 'u8[4096]{0}', space=vmem, size = 0x1000, scoped, tag = 'input window, operand 3, single buffered']
    #allocation4 [shape = 's32[1]{0}', space=sflag, size = 0x4, scoped, tag = 'scoped memory for tpu_custom_call.1']
    #allocation5 [shape = 's32[1]{0}', space=sflag, size = 0x4, scoped, tag = 'scoped memory for tpu_custom_call.1']
    #allocation6 [shape = 'u8[4096]{0}', space=vmem, size = 0x1000, scoped, tag = 'input window, operand 5, single buffered']
    #allocation7 [shape = 's32[1]{0}', space=sflag, size = 0x4, scoped, tag = 'scoped memory for tpu_custom_call.1']
    #allocation8 [shape = 'u8[8192]{0}', space=vmem, size = 0x2000, scoped, tag = 'input window, operand 13, single buffered']
    #allocation9 [shape = 'u8[8192]{0}', space=vmem, size = 0x2000, scoped, tag = 'input window, operand 14, single buffered']
    #allocation10 [shape = 's32[1]{0}', space=sflag, size = 0x4, scoped, tag = 'scoped memory for tpu_custom_call.1']
    #allocation11 [shape = 'u8[8192]{0}', space=vmem, size = 0x2000, scoped, tag = 'output window, operand 0, single buffered']
    %22 = vsyncpa [#allocation4], 0
    %23 = vsyncpa [#allocation7], 0
    %24 = vsyncpa [#allocation10], 0
    %25 = vsyncpa [#allocation5], 0
    // Predicated region
    $region2: #{tpu_custom_call.1} parent=1 // pred_check
      _
    $region3: #{tpu_custom_call.1} parent=1 // pred_check_branch
      %27 = sbr.rel (0) target = $region5
    $region4: #{tpu_custom_call.1} parent=1 // pred_region
      _
    $region5: #{tpu_custom_call.1} parent=1 // pred_fallthru
      _
    // Predicated region
    $region6: #{tpu_custom_call.1} parent=1 // pred_check
      _
    $region7: #{tpu_custom_call.1} parent=1 // pred_check_branch
      %29 = sbr.rel (0) target = $region9
    $region8: #{tpu_custom_call.1} parent=1 // pred_region
      _
    $region9: #{tpu_custom_call.1} parent=1 // pred_fallthru
      _
    // Predicated region
    $region10: #{tpu_custom_call.1} parent=1 // pred_check
      _
    $region11: #{tpu_custom_call.1} parent=1 // pred_check_branch
      %31 = sbr.rel (0) target = $region13
    $region12: #{tpu_custom_call.1} parent=1 // pred_region
      _
    $region13: #{tpu_custom_call.1} parent=1 // pred_fallthru
      _
    // Predicated region
    $region14: #{tpu_custom_call.1} parent=1 // pred_check
      _
    $region15: #{tpu_custom_call.1} parent=1 // pred_check_branch
      %33 = sbr.rel (0) target = $region17
    $region16: #{tpu_custom_call.1} parent=1 // pred_region
      %35 = vsyncadd [#allocation4], 0
      %s37 = sshll.u32 %s3, 4
      %s38 = int_to_ptr.hbm [resolvable:$true] %s37
      %s39 = sshll.u32 [#allocation3], 4
      %s40 = int_to_ptr.vmem [resolvable:$true] %s39
      %42 = dma.hbm_to_vmem [thread:$0]  %s38, 128, %s40, [#allocation4]
    $region17: #{tpu_custom_call.1} parent=1 // pred_fallthru
      _
    // Predicated region
    $region18: #{tpu_custom_call.1} parent=1 // pred_check
      _
    $region19: #{tpu_custom_call.1} parent=1 // pred_check_branch
      %44 = sbr.rel (0) target = $region21
    $region20: #{tpu_custom_call.1} parent=1 // pred_region
      _
    $region21: #{tpu_custom_call.1} parent=1 // pred_fallthru
      _
    // Predicated region
    $region22: #{tpu_custom_call.1} parent=1 // pred_check
      _
    $region23: #{tpu_custom_call.1} parent=1 // pred_check_branch
      %46 = sbr.rel (0) target = $region25
    $region24: #{tpu_custom_call.1} parent=1 // pred_region
      %48 = vsyncadd [#allocation7], 0
      %s50 = sshll.u32 %s5, 4
      %s51 = int_to_ptr.hbm [resolvable:$true] %s50
      %s52 = sshll.u32 [#allocation6], 4
      %s53 = int_to_ptr.vmem [resolvable:$true] %s52
      %55 = dma.hbm_to_vmem [thread:$0]  %s51, 128, %s53, [#allocation7]
    $region25: #{tpu_custom_call.1} parent=1 // pred_fallthru
      _
    // Predicated region
    $region26: #{tpu_custom_call.1} parent=1 // pred_check
      _
    $region27: #{tpu_custom_call.1} parent=1 // pred_check_branch
      %57 = sbr.rel (0) target = $region29
    $region28: #{tpu_custom_call.1} parent=1 // pred_region
      _
    $region29: #{tpu_custom_call.1} parent=1 // pred_fallthru
      _
    // Predicated region
    $region30: #{tpu_custom_call.1} parent=1 // pred_check
      _
    $region31: #{tpu_custom_call.1} parent=1 // pred_check_branch
      %59 = sbr.rel (0) target = $region33
    $region32: #{tpu_custom_call.1} parent=1 // pred_region
      _
    $region33: #{tpu_custom_call.1} parent=1 // pred_fallthru
      _
    // Predicated region
    $region34: #{tpu_custom_call.1} parent=1 // pred_check
      _
    $region35: #{tpu_custom_call.1} parent=1 // pred_check_branch
      %61 = sbr.rel (0) target = $region37
    $region36: #{tpu_custom_call.1} parent=1 // pred_region
      _
    $region37: #{tpu_custom_call.1} parent=1 // pred_fallthru
      _
    // Predicated region
    $region38: #{tpu_custom_call.1} parent=1 // pred_check
      _
    $region39: #{tpu_custom_call.1} parent=1 // pred_check_branch
      %63 = sbr.rel (0) target = $region41
    $region40: #{tpu_custom_call.1} parent=1 // pred_region
      _
    $region41: #{tpu_custom_call.1} parent=1 // pred_fallthru
      _
    // Predicated region
    $region42: #{tpu_custom_call.1} parent=1 // pred_check
      _
    $region43: #{tpu_custom_call.1} parent=1 // pred_check_branch
      %65 = sbr.rel (0) target = $region45
    $region44: #{tpu_custom_call.1} parent=1 // pred_region
      _
    $region45: #{tpu_custom_call.1} parent=1 // pred_fallthru
      _
    // Predicated region
    $region46: #{tpu_custom_call.1} parent=1 // pred_check
      _
    $region47: #{tpu_custom_call.1} parent=1 // pred_check_branch
      %67 = sbr.rel (0) target = $region49
    $region48: #{tpu_custom_call.1} parent=1 // pred_region
      _
    $region49: #{tpu_custom_call.1} parent=1 // pred_fallthru
      _
    // Predicated region
    $region50: #{tpu_custom_call.1} parent=1 // pred_check
      _
    $region51: #{tpu_custom_call.1} parent=1 // pred_check_branch
      %69 = sbr.rel (0) target = $region53
    $region52: #{tpu_custom_call.1} parent=1 // pred_region
      _
    $region53: #{tpu_custom_call.1} parent=1 // pred_fallthru
      _
    // Predicated region
    $region54: #{tpu_custom_call.1} parent=1 // pred_check
      _
    $region55: #{tpu_custom_call.1} parent=1 // pred_check_branch
      %71 = sbr.rel (0) target = $region57
    $region56: #{tpu_custom_call.1} parent=1 // pred_region
      %73 = vsyncadd [#allocation7], 0
      %s75 = sshll.u32 %s13, 4
      %s76 = int_to_ptr.hbm [resolvable:$true] %s75
      %s77 = sshll.u32 [#allocation8], 4
      %s78 = int_to_ptr.vmem [resolvable:$true] %s77
      %80 = dma.hbm_to_vmem [thread:$0]  %s76, 256, %s78, [#allocation7]
    $region57: #{tpu_custom_call.1} parent=1 // pred_fallthru
      _
    // Predicated region
    $region58: #{tpu_custom_call.1} parent=1 // pred_check
      _
    $region59: #{tpu_custom_call.1} parent=1 // pred_check_branch
      %82 = sbr.rel (0) target = $region61
    $region60: #{tpu_custom_call.1} parent=1 // pred_region
      %84 = vsyncadd [#allocation10], 0
      %s86 = sshll.u32 %s14, 4
      %s87 = int_to_ptr.hbm [resolvable:$true] %s86
      %s88 = sshll.u32 [#allocation9], 4
      %s89 = int_to_ptr.vmem [resolvable:$true] %s88
      %91 = dma.hbm_to_vmem [thread:$0]  %s87, 256, %s89, [#allocation10]
    $region61: #{tpu_custom_call.1} parent=1 // pred_fallthru
      _
    // Predicated region
    $region62: #{tpu_custom_call.1} parent=1 // pred_check
      _
    $region63: #{tpu_custom_call.1} parent=1 // pred_check_branch
      %93 = sbr.rel (0) target = $region65
    $region64: #{tpu_custom_call.1} parent=1 // pred_region
      %95 = dma.done [#allocation4], 128
    $region65: #{tpu_custom_call.1} parent=1 // pred_fallthru
      _
    // Predicated region
    $region66: #{tpu_custom_call.1} parent=1 // pred_check
      _
    $region67: #{tpu_custom_call.1} parent=1 // pred_check_branch
      %97 = sbr.rel (0) target = $region69
    $region68: #{tpu_custom_call.1} parent=1 // pred_region
      %99 = dma.done [#allocation7], 128
    $region69: #{tpu_custom_call.1} parent=1 // pred_fallthru
      _
    // Predicated region
    $region70: #{tpu_custom_call.1} parent=1 // pred_check
      _
    $region71: #{tpu_custom_call.1} parent=1 // pred_check_branch
      %101 = sbr.rel (0) target = $region73
    $region72: #{tpu_custom_call.1} parent=1 // pred_region
      %103 = dma.done [#allocation7], 256
    $region73: #{tpu_custom_call.1} parent=1 // pred_fallthru
      _
    // Predicated region
    $region74: #{tpu_custom_call.1} parent=1 // pred_check
      _
    $region75: #{tpu_custom_call.1} parent=1 // pred_check_branch
      %105 = sbr.rel (0) target = $region77
    $region76: #{tpu_custom_call.1} parent=1 // pred_region
      %107 = dma.done [#allocation10], 256
    $region77: #{tpu_custom_call.1} parent=1 // pred_fallthru
      _
    %v108 = vld [vmem:[%s0] sm:$0xff]
    %v109 = vld [vmem:[%s0 + $0x8] sm:$0xff]
    %v110 = vld [vmem:[%s1] sm:$0xff]
    %v111 = vld [vmem:[#allocation3] sm:$0xff]
    %v112 = vld [vmem:[#allocation6] sm:$0xff]
    %v113 = vld [vmem:[#allocation8] ss:$8 sm:$0x3]
    %v115 = vperm.slane %v113, 0
    %v116 = vperm.slane %v113, 1
    %v119 = vmul.f32 %v108, %v115
    %v120 = vmul.f32 %v109, %v116
    %s121 = scalar_lea.vmem [#allocation8], 1
    %v122 = vld [vmem:[%s121] ss:$8 sm:$0x3]
    %v124 = vperm.slane %v122, 0
    %v125 = vperm.slane %v122, 1
    %v128 = vmul.f32 %v108, %v124
    %v129 = vmul.f32 %v109, %v125
    %s130 = scalar_lea.vmem [#allocation8], 2
    %v131 = vld [vmem:[%s130] ss:$8 sm:$0x3]
    %v133 = vperm.slane %v131, 0
    %v134 = vperm.slane %v131, 1
    %v137 = vmul.f32 %v108, %v133
    %v138 = vmul.f32 %v109, %v134
    %s139 = scalar_lea.vmem [#allocation8], 4
    %v140 = vld [vmem:[%s139] ss:$8 sm:$0x3]
    %v142 = vperm.slane %v140, 0
    %v143 = vperm.slane %v140, 1
    %v146 = vmul.f32 %v108, %v142
    %v147 = vmul.f32 %v109, %v143
    %s148 = scalar_lea.vmem [#allocation8], 5
    %v149 = vld [vmem:[%s148] ss:$8 sm:$0x3]
    %v151 = vperm.slane %v149, 0
    %v152 = vperm.slane %v149, 1
    %v155 = vmul.f32 %v108, %v151
    %v156 = vmul.f32 %v109, %v152
    %s157 = scalar_lea.vmem [#allocation8], 6
    %v158 = vld [vmem:[%s157] ss:$8 sm:$0x3]
    %v160 = vperm.slane %v158, 0
    %v161 = vperm.slane %v158, 1
    %v164 = vmul.f32 %v108, %v160
    %v165 = vmul.f32 %v109, %v161
    %166 = vrot.lane.b32.xlu0 %v119, 51
    %v167 = vpop.permute.xlu0 %166
    %168 = vrot.lane.b32.xlu0 %v120, 51
    %v169 = vpop.permute.xlu0 %168
    %v170 = vlaneseq
    %v171 = vand.u32 %v170, 127
    %vm172 = vcmp.lt.s32.totalorder %v171, 51
    %v173 = vsel %vm172, %v167, %v169
    %v174 = vsel %vm172, %v169, %v167
    %176 = vset.pattern.permute.xlu0 0
    %177 = vperm.xlu0 %176, %v112
    %v178 = vpop.permute.xlu0 %177
    %v180 = vmul.f32 %v178, %v174
    %v181 = vmul.f32 %v178, %v173
    %v182 = vadd.f32 %v180, 0.0
    %v183 = vadd.f32 %v181, 0.0
    %184 = vrot.lane.b32.xlu0 %v128, 50
    %v185 = vpop.permute.xlu0 %184
    %186 = vrot.lane.b32.xlu0 %v129, 50
    %v187 = vpop.permute.xlu0 %186
    %vm188 = vcmp.lt.s32.totalorder %v171, 50
    %v189 = vsel %vm188, %v185, %v187
    %v190 = vsel %vm188, %v187, %v185
    %191 = vset.pattern.permute.xlu0 1
    %192 = vperm.xlu0 %191, %v112
    %v193 = vpop.permute.xlu0 %192
    %v195 = vmul.f32 %v193, %v190
    %v196 = vmul.f32 %v193, %v189
    %v197 = vadd.f32 %v182, %v195
    %v198 = vadd.f32 %v183, %v196
    %199 = vrot.lane.b32.xlu0 %v137, 49
    %v200 = vpop.permute.xlu0 %199
    %201 = vrot.lane.b32.xlu0 %v138, 49
    %v202 = vpop.permute.xlu0 %201
    %vm203 = vcmp.lt.s32.totalorder %v171, 49
    %v204 = vsel %vm203, %v200, %v202
    %v205 = vsel %vm203, %v202, %v200
    %206 = vset.pattern.permute.xlu0 2
    %207 = vperm.xlu0 %206, %v112
    %v208 = vpop.permute.xlu0 %207
    %v210 = vmul.f32 %v208, %v205
    %v211 = vmul.f32 %v208, %v204
    %v212 = vadd.f32 %v197, %v210
    %v213 = vadd.f32 %v198, %v211
    %214 = vrot.lane.b32.xlu0 %v108, 48
    %v215 = vpop.permute.xlu0 %214
    %216 = vrot.lane.b32.xlu0 %v109, 48
    %v217 = vpop.permute.xlu0 %216
    %vm218 = vcmp.lt.s32.totalorder %v171, 48
    %v219 = vsel %vm218, %v215, %v217
    %v220 = vsel %vm218, %v217, %v215
    %221 = vset.pattern.permute.xlu0 3
    %222 = vperm.xlu0 %221, %v112
    %v223 = vpop.permute.xlu0 %222
    %v225 = vmul.f32 %v223, %v220
    %v226 = vmul.f32 %v223, %v219
    %v227 = vadd.f32 %v212, %v225
    %v228 = vadd.f32 %v213, %v226
    %229 = vrot.lane.b32.xlu0 %v146, 47
    %v230 = vpop.permute.xlu0 %229
    %231 = vrot.lane.b32.xlu0 %v147, 47
    %v232 = vpop.permute.xlu0 %231
    %vm233 = vcmp.lt.s32.totalorder %v171, 47
    %v234 = vsel %vm233, %v230, %v232
    %v235 = vsel %vm233, %v232, %v230
    %236 = vset.pattern.permute.xlu0 4
    %237 = vperm.xlu0 %236, %v112
    %v238 = vpop.permute.xlu0 %237
    %v240 = vmul.f32 %v238, %v235
    %v241 = vmul.f32 %v238, %v234
    %v242 = vadd.f32 %v227, %v240
    %v243 = vadd.f32 %v228, %v241
    %244 = vrot.lane.b32.xlu0 %v155, 46
    %v245 = vpop.permute.xlu0 %244
    %246 = vrot.lane.b32.xlu0 %v156, 46
    %v247 = vpop.permute.xlu0 %246
    %vm248 = vcmp.lt.s32.totalorder %v171, 46
    %v249 = vsel %vm248, %v245, %v247
    %v250 = vsel %vm248, %v247, %v245
    %251 = vset.pattern.permute.xlu0 5
    %252 = vperm.xlu0 %251, %v112
    %v253 = vpop.permute.xlu0 %252
    %v255 = vmul.f32 %v253, %v250
    %v256 = vmul.f32 %v253, %v249
    %v257 = vadd.f32 %v242, %v255
    %v258 = vadd.f32 %v243, %v256
    %259 = vrot.lane.b32.xlu0 %v164, 45
    %v260 = vpop.permute.xlu0 %259
    %261 = vrot.lane.b32.xlu0 %v165, 45
    %v262 = vpop.permute.xlu0 %261
    %vm263 = vcmp.lt.s32.totalorder %v171, 45
    %v264 = vsel %vm263, %v260, %v262
    %v265 = vsel %vm263, %v262, %v260
    %266 = vset.pattern.permute.xlu0 6
    %267 = vperm.xlu0 %266, %v112
    %v268 = vpop.permute.xlu0 %267
    %v270 = vmul.f32 %v268, %v265
    %v271 = vmul.f32 %v268, %v264
    %v272 = vadd.f32 %v257, %v270
    %v273 = vadd.f32 %v258, %v271
    %v274 = vld [vmem:[#allocation9] ss:$8 sm:$0x3]
    %v276 = vperm.slane %v274, 0
    %v277 = vperm.slane %v274, 1
    %v280 = vmul.f32 %v276, %v272
    %v281 = vmul.f32 %v277, %v273
    %v282 = vadd.f32 %v280, 0.0
    %v283 = vadd.f32 %v281, 0.0
    %284 = vrot.lane.b32.xlu0 %v119, 35
    %v285 = vpop.permute.xlu0 %284
    %286 = vrot.lane.b32.xlu0 %v120, 35
    %v287 = vpop.permute.xlu0 %286
    %vm288 = vcmp.lt.s32.totalorder %v171, 35
    %v289 = vsel %vm288, %v285, %v287
    %v290 = vsel %vm288, %v287, %v285
    %291 = vset.pattern.permute.xlu0 7
    %292 = vperm.xlu0 %291, %v112
    %v293 = vpop.permute.xlu0 %292
    %v295 = vmul.f32 %v293, %v290
    %v296 = vmul.f32 %v293, %v289
    %v297 = vadd.f32 %v295, 0.0
    %v298 = vadd.f32 %v296, 0.0
    %299 = vrot.lane.b32.xlu0 %v128, 34
    %v300 = vpop.permute.xlu0 %299
    %301 = vrot.lane.b32.xlu0 %v129, 34
    %v302 = vpop.permute.xlu0 %301
    %vm303 = vcmp.lt.s32.totalorder %v171, 34
    %v304 = vsel %vm303, %v300, %v302
    %v305 = vsel %vm303, %v302, %v300
    %306 = vset.pattern.permute.xlu0 8
    %307 = vperm.xlu0 %306, %v112
    %v308 = vpop.permute.xlu0 %307
    %v310 = vmul.f32 %v308, %v305
    %v311 = vmul.f32 %v308, %v304
    %v312 = vadd.f32 %v297, %v310
    %v313 = vadd.f32 %v298, %v311
    %315 = vset.pattern.permute.xlu0 0
    %316 = vperm.xlu0 %315, %v111
    %v317 = vpop.permute.xlu0 %316
    %v319 = vmul.f32 %v317, %v305
    %v320 = vmul.f32 %v317, %v304
    %v321 = vadd.f32 %v319, 0.0
    %v322 = vadd.f32 %v320, 0.0
    %323 = vrot.lane.b32.xlu0 %v137, 33
    %v324 = vpop.permute.xlu0 %323
    %325 = vrot.lane.b32.xlu0 %v138, 33
    %v326 = vpop.permute.xlu0 %325
    %vm327 = vcmp.lt.s32.totalorder %v171, 33
    %v328 = vsel %vm327, %v324, %v326
    %v329 = vsel %vm327, %v326, %v324
    %330 = vset.pattern.permute.xlu0 9
    %331 = vperm.xlu0 %330, %v112
    %v332 = vpop.permute.xlu0 %331
    %v334 = vmul.f32 %v332, %v329
    %v335 = vmul.f32 %v332, %v328
    %v336 = vadd.f32 %v312, %v334
    %v337 = vadd.f32 %v313, %v335
    %338 = vset.pattern.permute.xlu0 1
    %339 = vperm.xlu0 %338, %v111
    %v340 = vpop.permute.xlu0 %339
    %v342 = vmul.f32 %v340, %v329
    %v343 = vmul.f32 %v340, %v328
    %v344 = vadd.f32 %v321, %v342
    %v345 = vadd.f32 %v322, %v343
    %346 = vrot.lane.b32.xlu0 %v108, 32
    %v347 = vpop.permute.xlu0 %346
    %348 = vrot.lane.b32.xlu0 %v109, 32
    %v349 = vpop.permute.xlu0 %348
    %vm350 = vcmp.lt.s32.totalorder %v171, 32
    %v351 = vsel %vm350, %v347, %v349
    %v352 = vsel %vm350, %v349, %v347
    %353 = vset.pattern.permute.xlu0 10
    %354 = vperm.xlu0 %353, %v112
    %v355 = vpop.permute.xlu0 %354
    %v357 = vmul.f32 %v355, %v352
    %v358 = vmul.f32 %v355, %v351
    %v359 = vadd.f32 %v336, %v357
    %v360 = vadd.f32 %v337, %v358
    %361 = vset.pattern.permute.xlu0 2
    %362 = vperm.xlu0 %361, %v111
    %v363 = vpop.permute.xlu0 %362
    %v365 = vmul.f32 %v363, %v352
    %v366 = vmul.f32 %v363, %v351
    %v367 = vadd.f32 %v344, %v365
    %v368 = vadd.f32 %v345, %v366
    %369 = vrot.lane.b32.xlu0 %v146, 31
    %v370 = vpop.permute.xlu0 %369
    %371 = vrot.lane.b32.xlu0 %v147, 31
    %v372 = vpop.permute.xlu0 %371
    %vm373 = vcmp.lt.s32.totalorder %v171, 31
    %v374 = vsel %vm373, %v370, %v372
    %v375 = vsel %vm373, %v372, %v370
    %376 = vset.pattern.permute.xlu0 11
    %377 = vperm.xlu0 %376, %v112
    %v378 = vpop.permute.xlu0 %377
    %v380 = vmul.f32 %v378, %v375
    %v381 = vmul.f32 %v378, %v374
    %v382 = vadd.f32 %v359, %v380
    %v383 = vadd.f32 %v360, %v381
    %384 = vset.pattern.permute.xlu0 3
    %385 = vperm.xlu0 %384, %v111
    %v386 = vpop.permute.xlu0 %385
    %v388 = vmul.f32 %v386, %v375
    %v389 = vmul.f32 %v386, %v374
    %v390 = vadd.f32 %v367, %v388
    %v391 = vadd.f32 %v368, %v389
    %392 = vrot.lane.b32.xlu0 %v155, 30
    %v393 = vpop.permute.xlu0 %392
    %394 = vrot.lane.b32.xlu0 %v156, 30
    %v395 = vpop.permute.xlu0 %394
    %vm396 = vcmp.lt.s32.totalorder %v171, 30
    %v397 = vsel %vm396, %v393, %v395
    %v398 = vsel %vm396, %v395, %v393
    %399 = vset.pattern.permute.xlu0 12
    %400 = vperm.xlu0 %399, %v112
    %v401 = vpop.permute.xlu0 %400
    %v403 = vmul.f32 %v401, %v398
    %v404 = vmul.f32 %v401, %v397
    %v405 = vadd.f32 %v382, %v403
    %v406 = vadd.f32 %v383, %v404
    %407 = vset.pattern.permute.xlu0 4
    %408 = vperm.xlu0 %407, %v111
    %v409 = vpop.permute.xlu0 %408
    %v411 = vmul.f32 %v409, %v398
    %v412 = vmul.f32 %v409, %v397
    %v413 = vadd.f32 %v390, %v411
    %v414 = vadd.f32 %v391, %v412
    %415 = vrot.lane.b32.xlu0 %v164, 29
    %v416 = vpop.permute.xlu0 %415
    %417 = vrot.lane.b32.xlu0 %v165, 29
    %v418 = vpop.permute.xlu0 %417
    %vm419 = vcmp.lt.s32.totalorder %v171, 29
    %v420 = vsel %vm419, %v416, %v418
    %v421 = vsel %vm419, %v418, %v416
    %422 = vset.pattern.permute.xlu0 13
    %423 = vperm.xlu0 %422, %v112
    %v424 = vpop.permute.xlu0 %423
    %v426 = vmul.f32 %v424, %v421
    %v427 = vmul.f32 %v424, %v420
    %v428 = vadd.f32 %v405, %v426
    %v429 = vadd.f32 %v406, %v427
    %s430 = scalar_lea.vmem [#allocation9], 1
    %v431 = vld [vmem:[%s430] ss:$8 sm:$0x3]
    %v433 = vperm.slane %v431, 0
    %v434 = vperm.slane %v431, 1
    %v437 = vmul.f32 %v433, %v428
    %v438 = vmul.f32 %v434, %v429
    %v439 = vadd.f32 %v282, %v437
    %v440 = vadd.f32 %v283, %v438
    %v441 = vmul.f32 %v433, %v413
    %v442 = vmul.f32 %v434, %v414
    %v443 = vadd.f32 %v441, 0.0
    %v444 = vadd.f32 %v442, 0.0
    %445 = vrot.lane.b32.xlu0 %v119, 19
    %v446 = vpop.permute.xlu0 %445
    %447 = vrot.lane.b32.xlu0 %v120, 19
    %v448 = vpop.permute.xlu0 %447
    %vm449 = vcmp.lt.s32.totalorder %v171, 19
    %v450 = vsel %vm449, %v446, %v448
    %v451 = vsel %vm449, %v448, %v446
    %452 = vset.pattern.permute.xlu0 14
    %453 = vperm.xlu0 %452, %v112
    %v454 = vpop.permute.xlu0 %453
    %v456 = vmul.f32 %v454, %v451
    %v457 = vmul.f32 %v454, %v450
    %v458 = vadd.f32 %v456, 0.0
    %v459 = vadd.f32 %v457, 0.0
    %460 = vrot.lane.b32.xlu0 %v128, 18
    %v461 = vpop.permute.xlu0 %460
    %462 = vrot.lane.b32.xlu0 %v129, 18
    %v463 = vpop.permute.xlu0 %462
    %vm464 = vcmp.lt.s32.totalorder %v171, 18
    %v465 = vsel %vm464, %v461, %v463
    %v466 = vsel %vm464, %v463, %v461
    %467 = vset.pattern.permute.xlu0 15
    %468 = vperm.xlu0 %467, %v112
    %v469 = vpop.permute.xlu0 %468
    %v471 = vmul.f32 %v469, %v466
    %v472 = vmul.f32 %v469, %v465
    %v473 = vadd.f32 %v458, %v471
    %v474 = vadd.f32 %v459, %v472
    %475 = vset.pattern.permute.xlu0 5
    %476 = vperm.xlu0 %475, %v111
    %v477 = vpop.permute.xlu0 %476
    %v479 = vmul.f32 %v477, %v466
    %v480 = vmul.f32 %v477, %v465
    %v481 = vadd.f32 %v479, 0.0
    %v482 = vadd.f32 %v480, 0.0
    %483 = vrot.lane.b32.xlu0 %v137, 17
    %v484 = vpop.permute.xlu0 %483
    %485 = vrot.lane.b32.xlu0 %v138, 17
    %v486 = vpop.permute.xlu0 %485
    %vm487 = vcmp.lt.s32.totalorder %v171, 17
    %v488 = vsel %vm487, %v484, %v486
    %v489 = vsel %vm487, %v486, %v484
    %490 = vset.pattern.permute.xlu0 16
    %491 = vperm.xlu0 %490, %v112
    %v492 = vpop.permute.xlu0 %491
    %v494 = vmul.f32 %v492, %v489
    %v495 = vmul.f32 %v492, %v488
    %v496 = vadd.f32 %v473, %v494
    %v497 = vadd.f32 %v474, %v495
    %498 = vset.pattern.permute.xlu0 6
    %499 = vperm.xlu0 %498, %v111
    %v500 = vpop.permute.xlu0 %499
    %v502 = vmul.f32 %v500, %v489
    %v503 = vmul.f32 %v500, %v488
    %v504 = vadd.f32 %v481, %v502
    %v505 = vadd.f32 %v482, %v503
    %507 = vset.pattern.permute.xlu0 0
    %508 = vperm.xlu0 %507, %v110
    %v509 = vpop.permute.xlu0 %508
    %v511 = vmul.f32 %v509, %v489
    %v512 = vmul.f32 %v509, %v488
    %v513 = vadd.f32 %v511, 0.0
    %v514 = vadd.f32 %v512, 0.0
    %515 = vrot.lane.b32.xlu0 %v108, 16
    %v516 = vpop.permute.xlu0 %515
    %517 = vrot.lane.b32.xlu0 %v109, 16
    %v518 = vpop.permute.xlu0 %517
    %vm519 = vcmp.lt.s32.totalorder %v171, 16
    %v520 = vsel %vm519, %v516, %v518
    %v521 = vsel %vm519, %v518, %v516
    %522 = vset.pattern.permute.xlu0 17
    %523 = vperm.xlu0 %522, %v112
    %v524 = vpop.permute.xlu0 %523
    %v526 = vmul.f32 %v524, %v521
    %v527 = vmul.f32 %v524, %v520
    %v528 = vadd.f32 %v496, %v526
    %v529 = vadd.f32 %v497, %v527
    %530 = vset.pattern.permute.xlu0 7
    %531 = vperm.xlu0 %530, %v111
    %v532 = vpop.permute.xlu0 %531
    %v534 = vmul.f32 %v532, %v521
    %v535 = vmul.f32 %v532, %v520
    %v536 = vadd.f32 %v504, %v534
    %v537 = vadd.f32 %v505, %v535
    %538 = vset.pattern.permute.xlu0 1
    %539 = vperm.xlu0 %538, %v110
    %v540 = vpop.permute.xlu0 %539
    %v542 = vmul.f32 %v540, %v521
    %v543 = vmul.f32 %v540, %v520
    %v544 = vadd.f32 %v513, %v542
    %v545 = vadd.f32 %v514, %v543
    %546 = vrot.lane.b32.xlu0 %v146, 15
    %v547 = vpop.permute.xlu0 %546
    %548 = vrot.lane.b32.xlu0 %v147, 15
    %v549 = vpop.permute.xlu0 %548
    %vm550 = vcmp.lt.s32.totalorder %v171, 15
    %v551 = vsel %vm550, %v547, %v549
    %v552 = vsel %vm550, %v549, %v547
    %553 = vset.pattern.permute.xlu0 18
    %554 = vperm.xlu0 %553, %v112
    %v555 = vpop.permute.xlu0 %554
    %v557 = vmul.f32 %v555, %v552
    %v558 = vmul.f32 %v555, %v551
    %v559 = vadd.f32 %v528, %v557
    %v560 = vadd.f32 %v529, %v558
    %561 = vset.pattern.permute.xlu0 8
    %562 = vperm.xlu0 %561, %v111
    %v563 = vpop.permute.xlu0 %562
    %v565 = vmul.f32 %v563, %v552
    %v566 = vmul.f32 %v563, %v551
    %v567 = vadd.f32 %v536, %v565
    %v568 = vadd.f32 %v537, %v566
    %569 = vset.pattern.permute.xlu0 2
    %570 = vperm.xlu0 %569, %v110
    %v571 = vpop.permute.xlu0 %570
    %v573 = vmul.f32 %v571, %v552
    %v574 = vmul.f32 %v571, %v551
    %v575 = vadd.f32 %v544, %v573
    %v576 = vadd.f32 %v545, %v574
    %577 = vrot.lane.b32.xlu0 %v155, 14
    %v578 = vpop.permute.xlu0 %577
    %579 = vrot.lane.b32.xlu0 %v156, 14
    %v580 = vpop.permute.xlu0 %579
    %vm581 = vcmp.lt.s32.totalorder %v171, 14
    %v582 = vsel %vm581, %v578, %v580
    %v583 = vsel %vm581, %v580, %v578
    %584 = vset.pattern.permute.xlu0 19
    %585 = vperm.xlu0 %584, %v112
    %v586 = vpop.permute.xlu0 %585
    %v588 = vmul.f32 %v586, %v583
    %v589 = vmul.f32 %v586, %v582
    %v590 = vadd.f32 %v559, %v588
    %v591 = vadd.f32 %v560, %v589
    %592 = vset.pattern.permute.xlu0 9
    %593 = vperm.xlu0 %592, %v111
    %v594 = vpop.permute.xlu0 %593
    %v596 = vmul.f32 %v594, %v583
    %v597 = vmul.f32 %v594, %v582
    %v598 = vadd.f32 %v567, %v596
    %v599 = vadd.f32 %v568, %v597
    %600 = vrot.lane.b32.xlu0 %v164, 13
    %v601 = vpop.permute.xlu0 %600
    %602 = vrot.lane.b32.xlu0 %v165, 13
    %v603 = vpop.permute.xlu0 %602
    %vm604 = vcmp.lt.s32.totalorder %v171, 13
    %v605 = vsel %vm604, %v601, %v603
    %v606 = vsel %vm604, %v603, %v601
    %607 = vset.pattern.permute.xlu0 20
    %608 = vperm.xlu0 %607, %v112
    %v609 = vpop.permute.xlu0 %608
    %v611 = vmul.f32 %v609, %v606
    %v612 = vmul.f32 %v609, %v605
    %v613 = vadd.f32 %v590, %v611
    %v614 = vadd.f32 %v591, %v612
    %s615 = scalar_lea.vmem [#allocation9], 2
    %v616 = vld [vmem:[%s615] ss:$8 sm:$0x3]
    %v618 = vperm.slane %v616, 0
    %v619 = vperm.slane %v616, 1
    %v622 = vmul.f32 %v618, %v613
    %v623 = vmul.f32 %v619, %v614
    %v624 = vadd.f32 %v439, %v622
    %v625 = vadd.f32 %v440, %v623
    %v626 = vmul.f32 %v618, %v598
    %v627 = vmul.f32 %v619, %v599
    %v628 = vadd.f32 %v443, %v626
    %v629 = vadd.f32 %v444, %v627
    %v630 = vmul.f32 %v618, %v575
    %v631 = vmul.f32 %v619, %v576
    %v632 = vadd.f32 %v630, 0.0
    %v633 = vadd.f32 %v631, 0.0
    %634 = vrot.lane.b32.xlu0 %v119, 3
    %v635 = vpop.permute.xlu0 %634
    %636 = vrot.lane.b32.xlu0 %v120, 3
    %v637 = vpop.permute.xlu0 %636
    %vm638 = vcmp.lt.s32.totalorder %v171, 3
    %v639 = vsel %vm638, %v635, %v637
    %v640 = vsel %vm638, %v637, %v635
    %641 = vset.pattern.permute.xlu0 21
    %642 = vperm.xlu0 %641, %v112
    %v643 = vpop.permute.xlu0 %642
    %v645 = vmul.f32 %v643, %v640
    %v646 = vmul.f32 %v643, %v639
    %v647 = vadd.f32 %v645, 0.0
    %v648 = vadd.f32 %v646, 0.0
    %649 = vrot.lane.b32.xlu0 %v128, 2
    %v650 = vpop.permute.xlu0 %649
    %651 = vrot.lane.b32.xlu0 %v129, 2
    %v652 = vpop.permute.xlu0 %651
    %vm653 = vcmp.lt.s32.totalorder %v171, 2
    %v654 = vsel %vm653, %v650, %v652
    %v655 = vsel %vm653, %v652, %v650
    %656 = vset.pattern.permute.xlu0 22
    %657 = vperm.xlu0 %656, %v112
    %v658 = vpop.permute.xlu0 %657
    %v660 = vmul.f32 %v658, %v655
    %v661 = vmul.f32 %v658, %v654
    %v662 = vadd.f32 %v647, %v660
    %v663 = vadd.f32 %v648, %v661
    %664 = vset.pattern.permute.xlu0 10
    %665 = vperm.xlu0 %664, %v111
    %v666 = vpop.permute.xlu0 %665
    %v668 = vmul.f32 %v666, %v655
    %v669 = vmul.f32 %v666, %v654
    %v670 = vadd.f32 %v668, 0.0
    %v671 = vadd.f32 %v669, 0.0
    %672 = vrot.lane.b32.xlu0 %v137, 1
    %v673 = vpop.permute.xlu0 %672
    %674 = vrot.lane.b32.xlu0 %v138, 1
    %v675 = vpop.permute.xlu0 %674
    %vm676 = vcmp.lt.s32.totalorder %v171, 1
    %v677 = vsel %vm676, %v673, %v675
    %v678 = vsel %vm676, %v675, %v673
    %679 = vset.pattern.permute.xlu0 23
    %680 = vperm.xlu0 %679, %v112
    %v681 = vpop.permute.xlu0 %680
    %v683 = vmul.f32 %v681, %v678
    %v684 = vmul.f32 %v681, %v677
    %v685 = vadd.f32 %v662, %v683
    %v686 = vadd.f32 %v663, %v684
    %687 = vset.pattern.permute.xlu0 11
    %688 = vperm.xlu0 %687, %v111
    %v689 = vpop.permute.xlu0 %688
    %v691 = vmul.f32 %v689, %v678
    %v692 = vmul.f32 %v689, %v677
    %v693 = vadd.f32 %v670, %v691
    %v694 = vadd.f32 %v671, %v692
    %695 = vset.pattern.permute.xlu0 3
    %696 = vperm.xlu0 %695, %v110
    %v697 = vpop.permute.xlu0 %696
    %v699 = vmul.f32 %v697, %v678
    %v700 = vmul.f32 %v697, %v677
    %v701 = vadd.f32 %v699, 0.0
    %v702 = vadd.f32 %v700, 0.0
    %703 = vset.pattern.permute.xlu0 24
    %704 = vperm.xlu0 %703, %v112
    %v705 = vpop.permute.xlu0 %704
    %v707 = vmul.f32 %v705, %v108
    %v708 = vmul.f32 %v705, %v109
    %v709 = vadd.f32 %v685, %v707
    %v710 = vadd.f32 %v686, %v708
    %711 = vset.pattern.permute.xlu0 12
    %712 = vperm.xlu0 %711, %v111
    %v713 = vpop.permute.xlu0 %712
    %v715 = vmul.f32 %v713, %v108
    %v716 = vmul.f32 %v713, %v109
    %v717 = vadd.f32 %v693, %v715
    %v718 = vadd.f32 %v694, %v716
    %719 = vset.pattern.permute.xlu0 4
    %720 = vperm.xlu0 %719, %v110
    %v721 = vpop.permute.xlu0 %720
    %v723 = vmul.f32 %v721, %v108
    %v724 = vmul.f32 %v721, %v109
    %v725 = vadd.f32 %v701, %v723
    %v726 = vadd.f32 %v702, %v724
    %727 = vrot.lane.b32.xlu0 %v146, 127
    %v728 = vpop.permute.xlu0 %727
    %729 = vrot.lane.b32.xlu0 %v147, 127
    %v730 = vpop.permute.xlu0 %729
    %vm731 = vcmp.lt.s32.totalorder %v171, 127
    %v732 = vsel %vm731, %v728, %v730
    %v733 = vsel %vm731, %v730, %v728
    %734 = vset.pattern.permute.xlu0 25
    %735 = vperm.xlu0 %734, %v112
    %v736 = vpop.permute.xlu0 %735
    %v738 = vmul.f32 %v736, %v732
    %v739 = vmul.f32 %v736, %v733
    %v740 = vadd.f32 %v709, %v738
    %v741 = vadd.f32 %v710, %v739
    %742 = vset.pattern.permute.xlu0 13
    %743 = vperm.xlu0 %742, %v111
    %v744 = vpop.permute.xlu0 %743
    %v746 = vmul.f32 %v744, %v732
    %v747 = vmul.f32 %v744, %v733
    %v748 = vadd.f32 %v717, %v746
    %v749 = vadd.f32 %v718, %v747
    %750 = vset.pattern.permute.xlu0 5
    %751 = vperm.xlu0 %750, %v110
    %v752 = vpop.permute.xlu0 %751
    %v754 = vmul.f32 %v752, %v732
    %v755 = vmul.f32 %v752, %v733
    %v756 = vadd.f32 %v725, %v754
    %v757 = vadd.f32 %v726, %v755
    %758 = vrot.lane.b32.xlu0 %v155, 126
    %v759 = vpop.permute.xlu0 %758
    %760 = vrot.lane.b32.xlu0 %v156, 126
    %v761 = vpop.permute.xlu0 %760
    %vm762 = vcmp.lt.s32.totalorder %v171, 126
    %v763 = vsel %vm762, %v759, %v761
    %v764 = vsel %vm762, %v761, %v759
    %765 = vset.pattern.permute.xlu0 26
    %766 = vperm.xlu0 %765, %v112
    %v767 = vpop.permute.xlu0 %766
    %v769 = vmul.f32 %v767, %v763
    %v770 = vmul.f32 %v767, %v764
    %v771 = vadd.f32 %v740, %v769
    %v772 = vadd.f32 %v741, %v770
    %773 = vset.pattern.permute.xlu0 14
    %774 = vperm.xlu0 %773, %v111
    %v775 = vpop.permute.xlu0 %774
    %v777 = vmul.f32 %v775, %v763
    %v778 = vmul.f32 %v775, %v764
    %v779 = vadd.f32 %v748, %v777
    %v780 = vadd.f32 %v749, %v778
    %781 = vrot.lane.b32.xlu0 %v164, 125
    %v782 = vpop.permute.xlu0 %781
    %783 = vrot.lane.b32.xlu0 %v165, 125
    %v784 = vpop.permute.xlu0 %783
    %vm785 = vcmp.lt.s32.totalorder %v171, 125
    %v786 = vsel %vm785, %v782, %v784
    %v787 = vsel %vm785, %v784, %v782
    %788 = vset.pattern.permute.xlu0 27
    %789 = vperm.xlu0 %788, %v112
    %v790 = vpop.permute.xlu0 %789
    %v792 = vmul.f32 %v790, %v786
    %v793 = vmul.f32 %v790, %v787
    %v794 = vadd.f32 %v771, %v792
    %v795 = vadd.f32 %v772, %v793
    %s796 = scalar_lea.vmem [#allocation9], 3
    %v797 = vld [vmem:[%s796] ss:$8 sm:$0x3]
    %v799 = vperm.slane %v797, 0
    %v800 = vperm.slane %v797, 1
    %v803 = vmul.f32 %v799, %v794
    %v804 = vmul.f32 %v800, %v795
    %v805 = vadd.f32 %v624, %v803
    %v806 = vadd.f32 %v625, %v804
    %v807 = vmul.f32 %v799, %v779
    %v808 = vmul.f32 %v800, %v780
    %v809 = vadd.f32 %v628, %v807
    %v810 = vadd.f32 %v629, %v808
    %v811 = vmul.f32 %v799, %v756
    %v812 = vmul.f32 %v800, %v757
    %v813 = vadd.f32 %v632, %v811
    %v814 = vadd.f32 %v633, %v812
    %815 = vrot.lane.b32.xlu0 %v119, 115
    %v816 = vpop.permute.xlu0 %815
    %817 = vrot.lane.b32.xlu0 %v120, 115
    %v818 = vpop.permute.xlu0 %817
    %vm819 = vcmp.lt.s32.totalorder %v171, 115
    %v820 = vsel %vm819, %v816, %v818
    %v821 = vsel %vm819, %v818, %v816
    %822 = vset.pattern.permute.xlu0 28
    %823 = vperm.xlu0 %822, %v112
    %v824 = vpop.permute.xlu0 %823
    %v826 = vmul.f32 %v824, %v820
    %v827 = vmul.f32 %v824, %v821
    %v828 = vadd.f32 %v826, 0.0
    %v829 = vadd.f32 %v827, 0.0
    %830 = vrot.lane.b32.xlu0 %v128, 114
    %v831 = vpop.permute.xlu0 %830
    %832 = vrot.lane.b32.xlu0 %v129, 114
    %v833 = vpop.permute.xlu0 %832
    %vm834 = vcmp.lt.s32.totalorder %v171, 114
    %v835 = vsel %vm834, %v831, %v833
    %v836 = vsel %vm834, %v833, %v831
    %837 = vset.pattern.permute.xlu0 29
    %838 = vperm.xlu0 %837, %v112
    %v839 = vpop.permute.xlu0 %838
    %v841 = vmul.f32 %v839, %v835
    %v842 = vmul.f32 %v839, %v836
    %v843 = vadd.f32 %v828, %v841
    %v844 = vadd.f32 %v829, %v842
    %845 = vset.pattern.permute.xlu0 15
    %846 = vperm.xlu0 %845, %v111
    %v847 = vpop.permute.xlu0 %846
    %v849 = vmul.f32 %v847, %v835
    %v850 = vmul.f32 %v847, %v836
    %v851 = vadd.f32 %v849, 0.0
    %v852 = vadd.f32 %v850, 0.0
    %853 = vrot.lane.b32.xlu0 %v137, 113
    %v854 = vpop.permute.xlu0 %853
    %855 = vrot.lane.b32.xlu0 %v138, 113
    %v856 = vpop.permute.xlu0 %855
    %vm857 = vcmp.lt.s32.totalorder %v171, 113
    %v858 = vsel %vm857, %v854, %v856
    %v859 = vsel %vm857, %v856, %v854
    %860 = vset.pattern.permute.xlu0 30
    %861 = vperm.xlu0 %860, %v112
    %v862 = vpop.permute.xlu0 %861
    %v864 = vmul.f32 %v862, %v858
    %v865 = vmul.f32 %v862, %v859
    %v866 = vadd.f32 %v843, %v864
    %v867 = vadd.f32 %v844, %v865
    %868 = vset.pattern.permute.xlu0 16
    %869 = vperm.xlu0 %868, %v111
    %v870 = vpop.permute.xlu0 %869
    %v872 = vmul.f32 %v870, %v858
    %v873 = vmul.f32 %v870, %v859
    %v874 = vadd.f32 %v851, %v872
    %v875 = vadd.f32 %v852, %v873
    %876 = vset.pattern.permute.xlu0 6
    %877 = vperm.xlu0 %876, %v110
    %v878 = vpop.permute.xlu0 %877
    %v880 = vmul.f32 %v878, %v858
    %v881 = vmul.f32 %v878, %v859
    %v882 = vadd.f32 %v880, 0.0
    %v883 = vadd.f32 %v881, 0.0
    %884 = vrot.lane.b32.xlu0 %v108, 112
    %v885 = vpop.permute.xlu0 %884
    %886 = vrot.lane.b32.xlu0 %v109, 112
    %v887 = vpop.permute.xlu0 %886
    %vm888 = vcmp.lt.s32.totalorder %v171, 112
    %v889 = vsel %vm888, %v885, %v887
    %v890 = vsel %vm888, %v887, %v885
    %891 = vset.pattern.permute.xlu0 31
    %892 = vperm.xlu0 %891, %v112
    %v893 = vpop.permute.xlu0 %892
    %v895 = vmul.f32 %v893, %v889
    %v896 = vmul.f32 %v893, %v890
    %v897 = vadd.f32 %v866, %v895
    %v898 = vadd.f32 %v867, %v896
    %899 = vset.pattern.permute.xlu0 17
    %900 = vperm.xlu0 %899, %v111
    %v901 = vpop.permute.xlu0 %900
    %v903 = vmul.f32 %v901, %v889
    %v904 = vmul.f32 %v901, %v890
    %v905 = vadd.f32 %v874, %v903
    %v906 = vadd.f32 %v875, %v904
    %907 = vset.pattern.permute.xlu0 7
    %908 = vperm.xlu0 %907, %v110
    %v909 = vpop.permute.xlu0 %908
    %v911 = vmul.f32 %v909, %v889
    %v912 = vmul.f32 %v909, %v890
    %v913 = vadd.f32 %v882, %v911
    %v914 = vadd.f32 %v883, %v912
    %915 = vrot.lane.b32.xlu0 %v146, 111
    %v916 = vpop.permute.xlu0 %915
    %917 = vrot.lane.b32.xlu0 %v147, 111
    %v918 = vpop.permute.xlu0 %917
    %vm919 = vcmp.lt.s32.totalorder %v171, 111
    %v920 = vsel %vm919, %v916, %v918
    %v921 = vsel %vm919, %v918, %v916
    %922 = vset.pattern.permute.xlu0 32
    %923 = vperm.xlu0 %922, %v112
    %v924 = vpop.permute.xlu0 %923
    %v926 = vmul.f32 %v924, %v920
    %v927 = vmul.f32 %v924, %v921
    %v928 = vadd.f32 %v897, %v926
    %v929 = vadd.f32 %v898, %v927
    %930 = vset.pattern.permute.xlu0 18
    %931 = vperm.xlu0 %930, %v111
    %v932 = vpop.permute.xlu0 %931
    %v934 = vmul.f32 %v932, %v920
    %v935 = vmul.f32 %v932, %v921
    %v936 = vadd.f32 %v905, %v934
    %v937 = vadd.f32 %v906, %v935
    %938 = vset.pattern.permute.xlu0 8
    %939 = vperm.xlu0 %938, %v110
    %v940 = vpop.permute.xlu0 %939
    %v942 = vmul.f32 %v940, %v920
    %v943 = vmul.f32 %v940, %v921
    %v944 = vadd.f32 %v913, %v942
    %v945 = vadd.f32 %v914, %v943
    %946 = vrot.lane.b32.xlu0 %v155, 110
    %v947 = vpop.permute.xlu0 %946
    %948 = vrot.lane.b32.xlu0 %v156, 110
    %v949 = vpop.permute.xlu0 %948
    %vm950 = vcmp.lt.s32.totalorder %v171, 110
    %v951 = vsel %vm950, %v947, %v949
    %v952 = vsel %vm950, %v949, %v947
    %953 = vset.pattern.permute.xlu0 33
    %954 = vperm.xlu0 %953, %v112
    %v955 = vpop.permute.xlu0 %954
    %v957 = vmul.f32 %v955, %v951
    %v958 = vmul.f32 %v955, %v952
    %v959 = vadd.f32 %v928, %v957
    %v960 = vadd.f32 %v929, %v958
    %961 = vset.pattern.permute.xlu0 19
    %962 = vperm.xlu0 %961, %v111
    %v963 = vpop.permute.xlu0 %962
    %v965 = vmul.f32 %v963, %v951
    %v966 = vmul.f32 %v963, %v952
    %v967 = vadd.f32 %v936, %v965
    %v968 = vadd.f32 %v937, %v966
    %969 = vrot.lane.b32.xlu0 %v164, 109
    %v970 = vpop.permute.xlu0 %969
    %971 = vrot.lane.b32.xlu0 %v165, 109
    %v972 = vpop.permute.xlu0 %971
    %vm973 = vcmp.lt.s32.totalorder %v171, 109
    %v974 = vsel %vm973, %v970, %v972
    %v975 = vsel %vm973, %v972, %v970
    %976 = vset.pattern.permute.xlu0 34
    %977 = vperm.xlu0 %976, %v112
    %v978 = vpop.permute.xlu0 %977
    %v980 = vmul.f32 %v978, %v974
    %v981 = vmul.f32 %v978, %v975
    %v982 = vadd.f32 %v959, %v980
    %v983 = vadd.f32 %v960, %v981
    %s984 = scalar_lea.vmem [#allocation9], 4
    %v985 = vld [vmem:[%s984] ss:$8 sm:$0x3]
    %v987 = vperm.slane %v985, 0
    %v988 = vperm.slane %v985, 1
    %v991 = vmul.f32 %v987, %v982
    %v992 = vmul.f32 %v988, %v983
    %v993 = vadd.f32 %v805, %v991
    %v994 = vadd.f32 %v806, %v992
    %v995 = vmul.f32 %v987, %v967
    %v996 = vmul.f32 %v988, %v968
    %v997 = vadd.f32 %v809, %v995
    %v998 = vadd.f32 %v810, %v996
    %v999 = vmul.f32 %v987, %v944
    %v1000 = vmul.f32 %v988, %v945
    %v1001 = vadd.f32 %v813, %v999
    %v1002 = vadd.f32 %v814, %v1000
    %1003 = vrot.lane.b32.xlu0 %v119, 99
    %v1004 = vpop.permute.xlu0 %1003
    %1005 = vrot.lane.b32.xlu0 %v120, 99
    %v1006 = vpop.permute.xlu0 %1005
    %vm1007 = vcmp.lt.s32.totalorder %v171, 99
    %v1008 = vsel %vm1007, %v1004, %v1006
    %v1009 = vsel %vm1007, %v1006, %v1004
    %1010 = vset.pattern.permute.xlu0 35
    %1011 = vperm.xlu0 %1010, %v112
    %v1012 = vpop.permute.xlu0 %1011
    %v1014 = vmul.f32 %v1012, %v1008
    %v1015 = vmul.f32 %v1012, %v1009
    %v1016 = vadd.f32 %v1014, 0.0
    %v1017 = vadd.f32 %v1015, 0.0
    %1018 = vrot.lane.b32.xlu0 %v128, 98
    %v1019 = vpop.permute.xlu0 %1018
    %1020 = vrot.lane.b32.xlu0 %v129, 98
    %v1021 = vpop.permute.xlu0 %1020
    %vm1022 = vcmp.lt.s32.totalorder %v171, 98
    %v1023 = vsel %vm1022, %v1019, %v1021
    %v1024 = vsel %vm1022, %v1021, %v1019
    %1025 = vset.pattern.permute.xlu0 36
    %1026 = vperm.xlu0 %1025, %v112
    %v1027 = vpop.permute.xlu0 %1026
    %v1029 = vmul.f32 %v1027, %v1023
    %v1030 = vmul.f32 %v1027, %v1024
    %v1031 = vadd.f32 %v1016, %v1029
    %v1032 = vadd.f32 %v1017, %v1030
    %1033 = vset.pattern.permute.xlu0 20
    %1034 = vperm.xlu0 %1033, %v111
    %v1035 = vpop.permute.xlu0 %1034
    %v1037 = vmul.f32 %v1035, %v1023
    %v1038 = vmul.f32 %v1035, %v1024
    %v1039 = vadd.f32 %v1037, 0.0
    %v1040 = vadd.f32 %v1038, 0.0
    %1041 = vrot.lane.b32.xlu0 %v137, 97
    %v1042 = vpop.permute.xlu0 %1041
    %1043 = vrot.lane.b32.xlu0 %v138, 97
    %v1044 = vpop.permute.xlu0 %1043
    %vm1045 = vcmp.lt.s32.totalorder %v171, 97
    %v1046 = vsel %vm1045, %v1042, %v1044
    %v1047 = vsel %vm1045, %v1044, %v1042
    %1048 = vset.pattern.permute.xlu0 37
    %1049 = vperm.xlu0 %1048, %v112
    %v1050 = vpop.permute.xlu0 %1049
    %v1052 = vmul.f32 %v1050, %v1046
    %v1053 = vmul.f32 %v1050, %v1047
    %v1054 = vadd.f32 %v1031, %v1052
    %v1055 = vadd.f32 %v1032, %v1053
    %1056 = vset.pattern.permute.xlu0 21
    %1057 = vperm.xlu0 %1056, %v111
    %v1058 = vpop.permute.xlu0 %1057
    %v1060 = vmul.f32 %v1058, %v1046
    %v1061 = vmul.f32 %v1058, %v1047
    %v1062 = vadd.f32 %v1039, %v1060
    %v1063 = vadd.f32 %v1040, %v1061
    %1064 = vrot.lane.b32.xlu0 %v108, 96
    %v1065 = vpop.permute.xlu0 %1064
    %1066 = vrot.lane.b32.xlu0 %v109, 96
    %v1067 = vpop.permute.xlu0 %1066
    %vm1068 = vcmp.lt.s32.totalorder %v171, 96
    %v1069 = vsel %vm1068, %v1065, %v1067
    %v1070 = vsel %vm1068, %v1067, %v1065
    %1071 = vset.pattern.permute.xlu0 38
    %1072 = vperm.xlu0 %1071, %v112
    %v1073 = vpop.permute.xlu0 %1072
    %v1075 = vmul.f32 %v1073, %v1069
    %v1076 = vmul.f32 %v1073, %v1070
    %v1077 = vadd.f32 %v1054, %v1075
    %v1078 = vadd.f32 %v1055, %v1076
    %1079 = vset.pattern.permute.xlu0 22
    %1080 = vperm.xlu0 %1079, %v111
    %v1081 = vpop.permute.xlu0 %1080
    %v1083 = vmul.f32 %v1081, %v1069
    %v1084 = vmul.f32 %v1081, %v1070
    %v1085 = vadd.f32 %v1062, %v1083
    %v1086 = vadd.f32 %v1063, %v1084
    %1087 = vrot.lane.b32.xlu0 %v146, 95
    %v1088 = vpop.permute.xlu0 %1087
    %1089 = vrot.lane.b32.xlu0 %v147, 95
    %v1090 = vpop.permute.xlu0 %1089
    %vm1091 = vcmp.lt.s32.totalorder %v171, 95
    %v1092 = vsel %vm1091, %v1088, %v1090
    %v1093 = vsel %vm1091, %v1090, %v1088
    %1094 = vset.pattern.permute.xlu0 39
    %1095 = vperm.xlu0 %1094, %v112
    %v1096 = vpop.permute.xlu0 %1095
    %v1098 = vmul.f32 %v1096, %v1092
    %v1099 = vmul.f32 %v1096, %v1093
    %v1100 = vadd.f32 %v1077, %v1098
    %v1101 = vadd.f32 %v1078, %v1099
    %1102 = vset.pattern.permute.xlu0 23
    %1103 = vperm.xlu0 %1102, %v111
    %v1104 = vpop.permute.xlu0 %1103
    %v1106 = vmul.f32 %v1104, %v1092
    %v1107 = vmul.f32 %v1104, %v1093
    %v1108 = vadd.f32 %v1085, %v1106
    %v1109 = vadd.f32 %v1086, %v1107
    %1110 = vrot.lane.b32.xlu0 %v155, 94
    %v1111 = vpop.permute.xlu0 %1110
    %1112 = vrot.lane.b32.xlu0 %v156, 94
    %v1113 = vpop.permute.xlu0 %1112
    %vm1114 = vcmp.lt.s32.totalorder %v171, 94
    %v1115 = vsel %vm1114, %v1111, %v1113
    %v1116 = vsel %vm1114, %v1113, %v1111
    %1117 = vset.pattern.permute.xlu0 40
    %1118 = vperm.xlu0 %1117, %v112
    %v1119 = vpop.permute.xlu0 %1118
    %v1121 = vmul.f32 %v1119, %v1115
    %v1122 = vmul.f32 %v1119, %v1116
    %v1123 = vadd.f32 %v1100, %v1121
    %v1124 = vadd.f32 %v1101, %v1122
    %1125 = vset.pattern.permute.xlu0 24
    %1126 = vperm.xlu0 %1125, %v111
    %v1127 = vpop.permute.xlu0 %1126
    %v1129 = vmul.f32 %v1127, %v1115
    %v1130 = vmul.f32 %v1127, %v1116
    %v1131 = vadd.f32 %v1108, %v1129
    %v1132 = vadd.f32 %v1109, %v1130
    %1133 = vrot.lane.b32.xlu0 %v164, 93
    %v1134 = vpop.permute.xlu0 %1133
    %1135 = vrot.lane.b32.xlu0 %v165, 93
    %v1136 = vpop.permute.xlu0 %1135
    %vm1137 = vcmp.lt.s32.totalorder %v171, 93
    %v1138 = vsel %vm1137, %v1134, %v1136
    %v1139 = vsel %vm1137, %v1136, %v1134
    %1140 = vset.pattern.permute.xlu0 41
    %1141 = vperm.xlu0 %1140, %v112
    %v1142 = vpop.permute.xlu0 %1141
    %v1144 = vmul.f32 %v1142, %v1138
    %v1145 = vmul.f32 %v1142, %v1139
    %v1146 = vadd.f32 %v1123, %v1144
    %v1147 = vadd.f32 %v1124, %v1145
    %s1148 = scalar_lea.vmem [#allocation9], 5
    %v1149 = vld [vmem:[%s1148] ss:$8 sm:$0x3]
    %v1151 = vperm.slane %v1149, 0
    %v1152 = vperm.slane %v1149, 1
    %v1155 = vmul.f32 %v1151, %v1146
    %v1156 = vmul.f32 %v1152, %v1147
    %v1157 = vadd.f32 %v993, %v1155
    %v1158 = vadd.f32 %v994, %v1156
    %v1159 = vmul.f32 %v1151, %v1131
    %v1160 = vmul.f32 %v1152, %v1132
    %v1161 = vadd.f32 %v997, %v1159
    %v1162 = vadd.f32 %v998, %v1160
    %1163 = vrot.lane.b32.xlu0 %v119, 83
    %v1164 = vpop.permute.xlu0 %1163
    %1165 = vrot.lane.b32.xlu0 %v120, 83
    %v1166 = vpop.permute.xlu0 %1165
    %vm1167 = vcmp.lt.s32.totalorder %v171, 83
    %v1168 = vsel %vm1167, %v1164, %v1166
    %v1169 = vsel %vm1167, %v1166, %v1164
    %1170 = vset.pattern.permute.xlu0 42
    %1171 = vperm.xlu0 %1170, %v112
    %v1172 = vpop.permute.xlu0 %1171
    %v1174 = vmul.f32 %v1172, %v1168
    %v1175 = vmul.f32 %v1172, %v1169
    %v1176 = vadd.f32 %v1174, 0.0
    %v1177 = vadd.f32 %v1175, 0.0
    %1178 = vrot.lane.b32.xlu0 %v128, 82
    %v1179 = vpop.permute.xlu0 %1178
    %1180 = vrot.lane.b32.xlu0 %v129, 82
    %v1181 = vpop.permute.xlu0 %1180
    %vm1182 = vcmp.lt.s32.totalorder %v171, 82
    %v1183 = vsel %vm1182, %v1179, %v1181
    %v1184 = vsel %vm1182, %v1181, %v1179
    %1185 = vset.pattern.permute.xlu0 43
    %1186 = vperm.xlu0 %1185, %v112
    %v1187 = vpop.permute.xlu0 %1186
    %v1189 = vmul.f32 %v1187, %v1183
    %v1190 = vmul.f32 %v1187, %v1184
    %v1191 = vadd.f32 %v1176, %v1189
    %v1192 = vadd.f32 %v1177, %v1190
    %1193 = vrot.lane.b32.xlu0 %v137, 81
    %v1194 = vpop.permute.xlu0 %1193
    %1195 = vrot.lane.b32.xlu0 %v138, 81
    %v1196 = vpop.permute.xlu0 %1195
    %vm1197 = vcmp.lt.s32.totalorder %v171, 81
    %v1198 = vsel %vm1197, %v1194, %v1196
    %v1199 = vsel %vm1197, %v1196, %v1194
    %1200 = vset.pattern.permute.xlu0 44
    %1201 = vperm.xlu0 %1200, %v112
    %v1202 = vpop.permute.xlu0 %1201
    %v1204 = vmul.f32 %v1202, %v1198
    %v1205 = vmul.f32 %v1202, %v1199
    %v1206 = vadd.f32 %v1191, %v1204
    %v1207 = vadd.f32 %v1192, %v1205
    %1208 = vrot.lane.b32.xlu0 %v108, 80
    %v1209 = vpop.permute.xlu0 %1208
    %1210 = vrot.lane.b32.xlu0 %v109, 80
    %v1211 = vpop.permute.xlu0 %1210
    %vm1212 = vcmp.lt.s32.totalorder %v171, 80
    %v1213 = vsel %vm1212, %v1209, %v1211
    %v1214 = vsel %vm1212, %v1211, %v1209
    %1215 = vset.pattern.permute.xlu0 45
    %1216 = vperm.xlu0 %1215, %v112
    %v1217 = vpop.permute.xlu0 %1216
    %v1219 = vmul.f32 %v1217, %v1213
    %v1220 = vmul.f32 %v1217, %v1214
    %v1221 = vadd.f32 %v1206, %v1219
    %v1222 = vadd.f32 %v1207, %v1220
    %1223 = vrot.lane.b32.xlu0 %v146, 79
    %v1224 = vpop.permute.xlu0 %1223
    %1225 = vrot.lane.b32.xlu0 %v147, 79
    %v1226 = vpop.permute.xlu0 %1225
    %vm1227 = vcmp.lt.s32.totalorder %v171, 79
    %v1228 = vsel %vm1227, %v1224, %v1226
    %v1229 = vsel %vm1227, %v1226, %v1224
    %1230 = vset.pattern.permute.xlu0 46
    %1231 = vperm.xlu0 %1230, %v112
    %v1232 = vpop.permute.xlu0 %1231
    %v1234 = vmul.f32 %v1232, %v1228
    %v1235 = vmul.f32 %v1232, %v1229
    %v1236 = vadd.f32 %v1221, %v1234
    %v1237 = vadd.f32 %v1222, %v1235
    %1238 = vrot.lane.b32.xlu0 %v155, 78
    %v1239 = vpop.permute.xlu0 %1238
    %1240 = vrot.lane.b32.xlu0 %v156, 78
    %v1241 = vpop.permute.xlu0 %1240
    %vm1242 = vcmp.lt.s32.totalorder %v171, 78
    %v1243 = vsel %vm1242, %v1239, %v1241
    %v1244 = vsel %vm1242, %v1241, %v1239
    %1245 = vset.pattern.permute.xlu0 47
    %1246 = vperm.xlu0 %1245, %v112
    %v1247 = vpop.permute.xlu0 %1246
    %v1249 = vmul.f32 %v1247, %v1243
    %v1250 = vmul.f32 %v1247, %v1244
    %v1251 = vadd.f32 %v1236, %v1249
    %v1252 = vadd.f32 %v1237, %v1250
    %1253 = vrot.lane.b32.xlu0 %v164, 77
    %v1254 = vpop.permute.xlu0 %1253
    %1255 = vrot.lane.b32.xlu0 %v165, 77
    %v1256 = vpop.permute.xlu0 %1255
    %vm1257 = vcmp.lt.s32.totalorder %v171, 77
    %v1258 = vsel %vm1257, %v1254, %v1256
    %v1259 = vsel %vm1257, %v1256, %v1254
    %1260 = vset.pattern.permute.xlu0 48
    %1261 = vperm.xlu0 %1260, %v112
    %v1262 = vpop.permute.xlu0 %1261
    %v1264 = vmul.f32 %v1262, %v1258
    %v1265 = vmul.f32 %v1262, %v1259
    %v1266 = vadd.f32 %v1251, %v1264
    %v1267 = vadd.f32 %v1252, %v1265
    %s1268 = scalar_lea.vmem [#allocation9], 6
    %v1269 = vld [vmem:[%s1268] ss:$8 sm:$0x3]
    %v1271 = vperm.slane %v1269, 0
    %v1272 = vperm.slane %v1269, 1
    %v1275 = vmul.f32 %v1271, %v1266
    %v1276 = vmul.f32 %v1272, %v1267
    %v1277 = vadd.f32 %v1157, %v1275
    %v1278 = vadd.f32 %v1158, %v1276
    %v1279 = vld [vmem:[%s2] sm:$0xff]
    %1281 = vset.pattern.permute.xlu0 0
    %1282 = vperm.xlu0 %1281, %v1279
    %v1283 = vpop.permute.xlu0 %1282
    %v1285 = vadd.f32 %v1001, %v1283
    %v1286 = vadd.f32 %v1002, %v1283
    %v1287 = vld [vmem:[%s4] sm:$0xff]
    %1289 = vset.pattern.permute.xlu0 0
    %1290 = vperm.xlu0 %1289, %v1287
    %v1291 = vpop.permute.xlu0 %1290
    %v1293 = vadd.f32 %v1161, %v1291
    %v1294 = vadd.f32 %v1162, %v1291
    %v1295 = vld [vmem:[%s6] sm:$0xff]
    %1297 = vset.pattern.permute.xlu0 0
    %1298 = vperm.xlu0 %1297, %v1295
    %v1299 = vpop.permute.xlu0 %1298
    %v1301 = vadd.f32 %v1277, %v1299
    %v1302 = vadd.f32 %v1278, %v1299
    %v1303 = vld [vmem:[%s7] sm:$0xf]
    %vm1304 = vcmask 1043456
    %v1305 = vsel %vm1304, %v1285, 0.0
    %v1306 = vsel %vm1304, %v1286, 0.0
    %v1307 = vadd.f32 %v1305, %v1306
    %1308 = vadd.xlane.f32.xlu0 %v1307
    %v1309 = vpop.xlane.xlu0 %1308
    %v1310 = vmul.f32 %v1309, 0.00390625
    %v1311 = vsel %vm1304, %v1293, 0.0
    %v1312 = vsel %vm1304, %v1294, 0.0
    %v1313 = vadd.f32 %v1311, %v1312
    %1314 = vadd.xlane.f32.xlu0 %v1313
    %v1315 = vpop.xlane.xlu0 %1314
    %v1316 = vmul.f32 %v1315, 0.00390625
    %v1317 = vsel %vm1304, %v1301, 0.0
    %v1318 = vsel %vm1304, %v1302, 0.0
    %v1319 = vadd.f32 %v1317, %v1318
    %1320 = vadd.xlane.f32.xlu0 %v1319
    %v1321 = vpop.xlane.xlu0 %1320
    %v1322 = vmul.f32 %v1321, 0.00390625
    %1324 = vrot.lane.b32.xlu0 %v1303, 124
    %v1325 = vpop.permute.xlu0 %1324
    %vm1326 = vcmask 31744
    %v1327 = vsel %vm1326, %v1325, 0
    %v1330 = vsel %vm1304, %v1316, 0
    %1332 = vmatpush.msra.mxu0 0.0
    %1333 = vmatpush.msra.mxu0 0.0
    %1334 = vmatpush.msra.mxu0 0.0
    %1335 = vmatpush.msra.mxu0 0.0
    %1336 = vmatpush.msra.mxu0 0.0
    %1337 = vmatpush.msra.mxu0 0.0
    %1338 = vmatpush.msra.mxu0 0.0
    %1339 = vmatpush.msra.mxu0 0.0
    %1340 = vmatpush.msra.mxu0 0.0
    %1341 = vmatpush.msra.mxu0 0.0
    %1342 = vmatpush.msra.mxu0 0.0
    %1343 = vmatpush.msra.mxu0 0.0
    %1344 = vmatpush.msra.mxu0 0.0
    %1345 = vmatpush.msra.mxu0 0.0
    %1346 = vmatpush.msra.mxu0 0.0
    %1347 = vmatpush.msra.mxu0 %v1330
    %1348 = vmatmul.f32.gmra.mxu0 %v1327
    %v1349 = vpop.f32.mrf.mxu0
    %v1350 = vadd.f32 0.0, %v1349
    %1351 = vdwg.mxu0
    %v1352 = vsel %vm1326, %v1303, 0
    %v1355 = vsel %vm1304, %v1310, 0
    %1357 = vmatpush.msra.mxu0 0.0
    %1358 = vmatpush.msra.mxu0 0.0
    %1359 = vmatpush.msra.mxu0 0.0
    %1360 = vmatpush.msra.mxu0 0.0
    %1361 = vmatpush.msra.mxu0 0.0
    %1362 = vmatpush.msra.mxu0 0.0
    %1363 = vmatpush.msra.mxu0 0.0
    %1364 = vmatpush.msra.mxu0 0.0
    %1365 = vmatpush.msra.mxu0 0.0
    %1366 = vmatpush.msra.mxu0 0.0
    %1367 = vmatpush.msra.mxu0 0.0
    %1368 = vmatpush.msra.mxu0 0.0
    %1369 = vmatpush.msra.mxu0 0.0
    %1370 = vmatpush.msra.mxu0 0.0
    %1371 = vmatpush.msra.mxu0 0.0
    %1372 = vmatpush.msra.mxu0 %v1355
    %1373 = vmatmul.f32.gmra.mxu0 %v1352
    %v1374 = vpop.f32.mrf.mxu0
    %v1375 = vadd.f32 %v1350, %v1374
    %1376 = vdwg.mxu0
    %1377 = vrot.lane.b32.xlu0 %v1303, 120
    %v1378 = vpop.permute.xlu0 %1377
    %v1379 = vsel %vm1326, %v1378, 0
    %v1382 = vsel %vm1304, %v1322, 0
    %1384 = vmatpush.msra.mxu0 0.0
    %1385 = vmatpush.msra.mxu0 0.0
    %1386 = vmatpush.msra.mxu0 0.0
    %1387 = vmatpush.msra.mxu0 0.0
    %1388 = vmatpush.msra.mxu0 0.0
    %1389 = vmatpush.msra.mxu0 0.0
    %1390 = vmatpush.msra.mxu0 0.0
    %1391 = vmatpush.msra.mxu0 0.0
    %1392 = vmatpush.msra.mxu0 0.0
    %1393 = vmatpush.msra.mxu0 0.0
    %1394 = vmatpush.msra.mxu0 0.0
    %1395 = vmatpush.msra.mxu0 0.0
    %1396 = vmatpush.msra.mxu0 0.0
    %1397 = vmatpush.msra.mxu0 0.0
    %1398 = vmatpush.msra.mxu0 0.0
    %1399 = vmatpush.msra.mxu0 %v1382
    %1400 = vmatmul.f32.gmra.mxu0 %v1379
    %v1401 = vpop.f32.mrf.mxu0
    %v1402 = vadd.f32 0.0, %v1401
    %1403 = vdwg.mxu0
    %v1404 = vadd.f32 %v1375, %v1402
    %v1405 = vld [vmem:[%s8] sm:$0xf]
    %v1406 = vadd.f32 %v1404, %v1405
    %v1407 = vld [vmem:[%s9] sm:$0x1]
    %v1408 = vld [vmem:[#allocation2] sm:$0x1]
    %v1410 = vsel %vm1326, %v1407, 0
    %v1413 = vsel %vm1304, %v1406, 0
    %1415 = vmatpush.msra.mxu0 0.0
    %1416 = vmatpush.msra.mxu0 0.0
    %1417 = vmatpush.msra.mxu0 0.0
    %1418 = vmatpush.msra.mxu0 0.0
    %1419 = vmatpush.msra.mxu0 0.0
    %1420 = vmatpush.msra.mxu0 0.0
    %1421 = vmatpush.msra.mxu0 0.0
    %1422 = vmatpush.msra.mxu0 0.0
    %1423 = vmatpush.msra.mxu0 0.0
    %1424 = vmatpush.msra.mxu0 0.0
    %1425 = vmatpush.msra.mxu0 0.0
    %1426 = vmatpush.msra.mxu0 0.0
    %1427 = vmatpush.msra.mxu0 0.0
    %1428 = vmatpush.msra.mxu0 0.0
    %1429 = vmatpush.msra.mxu0 0.0
    %1430 = vmatpush.msra.mxu0 %v1413
    %1431 = vmatmul.f32.gmra.mxu0 %v1410
    %v1432 = vpop.f32.mrf.mxu0
    %v1433 = vadd.f32 %v1408, %v1432
    %1434 = vdwg.mxu0
    %v1435 = vmax.f32 %v1433, 0.0
    %v1436 = vand.u32 2147483647, %v1433
    %v1437 = vsub.f32 0.0, %v1436
    %v1438 = vmul.f32 %v1437, 1.442695
    %v1439 = vpow.pop %v1438
    %v1440 = vadd.f32 %v1439, 1.0
    %v1441 = vlog2.pop %v1440
    %v1442 = vmul.f32 %v1441, 0.6931472
    %v1443 = vadd.f32 %v1435, %v1442
    %v1444 = vtanh.pop %v1443
    %v1445 = vmul.f32 %v1433, %v1444
    %v1446 = vld [vmem:[%s11] sm:$0x7]
    %v1447 = vld [vmem:[%s12] sm:$0x7]
    %vm1448 = vcmask 7168
    %v1450 = vsel %vm1448, %v1446, 0
    %vm1452 = vcmask 1040384
    %v1454 = vsel %vm1452, %v1445, 0
    %1456 = vmatpush.msra.mxu0 0.0
    %1457 = vmatpush.msra.mxu0 0.0
    %1458 = vmatpush.msra.mxu0 0.0
    %1459 = vmatpush.msra.mxu0 0.0
    %1460 = vmatpush.msra.mxu0 0.0
    %1461 = vmatpush.msra.mxu0 0.0
    %1462 = vmatpush.msra.mxu0 0.0
    %1463 = vmatpush.msra.mxu0 0.0
    %1464 = vmatpush.msra.mxu0 0.0
    %1465 = vmatpush.msra.mxu0 0.0
    %1466 = vmatpush.msra.mxu0 0.0
    %1467 = vmatpush.msra.mxu0 0.0
    %1468 = vmatpush.msra.mxu0 0.0
    %1469 = vmatpush.msra.mxu0 0.0
    %1470 = vmatpush.msra.mxu0 0.0
    %1471 = vmatpush.msra.mxu0 %v1454
    %1472 = vmatmul.f32.gmra.mxu0 %v1450
    %v1473 = vpop.f32.mrf.mxu0
    %v1474 = vadd.f32 %v1447, %v1473
    %1475 = vdwg.mxu0
    %v1477 = vrot.slane %v1474, 1
    %v1479 = vmax.f32 %v1474, %v1477
    %v1480 = vrot.slane %v1474, 2
    %v1482 = vmax.f32 %v1479, %v1480
    %v1483 = vsub.f32 %v1474, %v1482
    %v1484 = vmul.f32 %v1483, 1.442695
    %v1485 = vpow.pop %v1484
    %v1487 = vrot.slane %v1482, 7
    %v1489 = vsub.f32 %v1474, %v1487
    %v1490 = vmul.f32 %v1489, 1.442695
    %v1491 = vpow.pop %v1490
    %v1492 = vrot.slane %v1482, 6
    %v1494 = vsub.f32 %v1474, %v1492
    %v1495 = vmul.f32 %v1494, 1.442695
    %v1496 = vpow.pop %v1495
    %v1498 = vrot.slane %v1491, 1
    %v1500 = vadd.f32 %v1485, %v1498
    %v1502 = vrot.slane %v1496, 2
    %v1504 = vadd.f32 %v1500, %v1502
    %v1505 = vrcp.pop %v1504
    %v1506 = vmul.f32 %v1504, %v1505
    %v1507 = vsub.f32 1.0, %v1506
    %v1508 = vmul.f32 %v1505, %v1507
    %v1509 = vadd.f32 %v1505, %v1508
    %vm1510 = vweird.f32 %v1504
    %vm1511 = vweird.f32 %v1505
    %vm1512 = vmor %vm1510, %vm1511
    %v1513 = vsel %vm1512, %v1505, %v1509
    %v1514 = vand.u32 2147483647, %v1504
    %vm1515 = vcmp.eq.f32.partialorder %v1514, 8.507059e+37
    %v1516 = vand.u32 %v1504, 2147483648
    %v1517 = vor.u32 1.1754944e-38, %v1516
    %v1518 = vsel %vm1515, %v1517, %v1513
    %v1519 = vmul.f32 1.0, %v1518
    %v1520 = vmul.f32 %v1485, %v1519
    %v1522 = vrot.slane %v1519, 7
    %v1524 = vmul.f32 %v1491, %v1522
    %v1525 = vrot.slane %v1519, 6
    %v1527 = vmul.f32 %v1496, %v1525
    %s1529 = vtos %v1520
    %v1530 = vstv %s1529
    %v1532 = vmul.f32 %v1530, %v1285
    %v1533 = vmul.f32 %v1530, %v1286
    %v1535 = vrot.slane %v1524, 1
    %s1536 = vtos %v1535
    %v1537 = vstv %s1536
    %v1539 = vmul.f32 %v1537, %v1293
    %v1540 = vmul.f32 %v1537, %v1294
    %v1541 = vadd.f32 %v1532, %v1539
    %v1542 = vadd.f32 %v1533, %v1540
    %v1544 = vrot.slane %v1527, 2
    %s1545 = vtos %v1544
    %v1546 = vstv %s1545
    %v1548 = vmul.f32 %v1546, %v1301
    %v1549 = vmul.f32 %v1546, %v1302
    %v1550 = vadd.f32 %v1541, %v1548
    %v1551 = vadd.f32 %v1542, %v1549
    %1552 = vst [vmem:[#allocation11] sm:$0xf] %v1550
    %1553 = vst [vmem:[#allocation11 + $0x8] sm:$0xf] %v1551
    %vm1554 = vcmask 1047556
    %v1555 = vsel %vm1554, %v1285, 0.0
    %v1556 = vsel %vm1554, %v1286, 0.0
    %v1557 = vadd.f32 %v1555, %v1556
    %1558 = vadd.xlane.f32.xlu0 %v1557
    %v1559 = vpop.xlane.xlu0 %1558
    %v1560 = vmul.f32 %v1559, 0.00390625
    %v1561 = vsel %vm1554, %v1293, 0.0
    %v1562 = vsel %vm1554, %v1294, 0.0
    %v1563 = vadd.f32 %v1561, %v1562
    %1564 = vadd.xlane.f32.xlu0 %v1563
    %v1565 = vpop.xlane.xlu0 %1564
    %v1566 = vmul.f32 %v1565, 0.00390625
    %v1567 = vsel %vm1554, %v1301, 0.0
    %v1568 = vsel %vm1554, %v1302, 0.0
    %v1569 = vadd.f32 %v1567, %v1568
    %1570 = vadd.xlane.f32.xlu0 %v1569
    %v1571 = vpop.xlane.xlu0 %1570
    %v1572 = vmul.f32 %v1571, 0.00390625
    %v1574 = vrot.slane %v1566, 4
    %v1575 = vsel %vm1304, %v1574, 0
    %1577 = vmatpush.msra.mxu0 0.0
    %1578 = vmatpush.msra.mxu0 0.0
    %1579 = vmatpush.msra.mxu0 0.0
    %1580 = vmatpush.msra.mxu0 0.0
    %1581 = vmatpush.msra.mxu0 0.0
    %1582 = vmatpush.msra.mxu0 0.0
    %1583 = vmatpush.msra.mxu0 0.0
    %1584 = vmatpush.msra.mxu0 0.0
    %1585 = vmatpush.msra.mxu0 0.0
    %1586 = vmatpush.msra.mxu0 0.0
    %1587 = vmatpush.msra.mxu0 0.0
    %1588 = vmatpush.msra.mxu0 0.0
    %1589 = vmatpush.msra.mxu0 0.0
    %1590 = vmatpush.msra.mxu0 0.0
    %1591 = vmatpush.msra.mxu0 0.0
    %1592 = vmatpush.msra.mxu0 %v1575
    %1593 = vmatmul.f32.gmra.mxu0 %v1327
    %v1594 = vpop.f32.mrf.mxu0
    %v1595 = vadd.f32 0.0, %v1594
    %1596 = vdwg.mxu0
    %v1598 = vrot.slane %v1560, 4
    %v1599 = vsel %vm1304, %v1598, 0
    %1601 = vmatpush.msra.mxu0 0.0
    %1602 = vmatpush.msra.mxu0 0.0
    %1603 = vmatpush.msra.mxu0 0.0
    %1604 = vmatpush.msra.mxu0 0.0
    %1605 = vmatpush.msra.mxu0 0.0
    %1606 = vmatpush.msra.mxu0 0.0
    %1607 = vmatpush.msra.mxu0 0.0
    %1608 = vmatpush.msra.mxu0 0.0
    %1609 = vmatpush.msra.mxu0 0.0
    %1610 = vmatpush.msra.mxu0 0.0
    %1611 = vmatpush.msra.mxu0 0.0
    %1612 = vmatpush.msra.mxu0 0.0
    %1613 = vmatpush.msra.mxu0 0.0
    %1614 = vmatpush.msra.mxu0 0.0
    %1615 = vmatpush.msra.mxu0 0.0
    %1616 = vmatpush.msra.mxu0 %v1599
    %1617 = vmatmul.f32.gmra.mxu0 %v1352
    %v1618 = vpop.f32.mrf.mxu0
    %v1619 = vadd.f32 %v1595, %v1618
    %1620 = vdwg.mxu0
    %v1622 = vrot.slane %v1572, 4
    %v1623 = vsel %vm1304, %v1622, 0
    %1625 = vmatpush.msra.mxu0 0.0
    %1626 = vmatpush.msra.mxu0 0.0
    %1627 = vmatpush.msra.mxu0 0.0
    %1628 = vmatpush.msra.mxu0 0.0
    %1629 = vmatpush.msra.mxu0 0.0
    %1630 = vmatpush.msra.mxu0 0.0
    %1631 = vmatpush.msra.mxu0 0.0
    %1632 = vmatpush.msra.mxu0 0.0
    %1633 = vmatpush.msra.mxu0 0.0
    %1634 = vmatpush.msra.mxu0 0.0
    %1635 = vmatpush.msra.mxu0 0.0
    %1636 = vmatpush.msra.mxu0 0.0
    %1637 = vmatpush.msra.mxu0 0.0
    %1638 = vmatpush.msra.mxu0 0.0
    %1639 = vmatpush.msra.mxu0 0.0
    %1640 = vmatpush.msra.mxu0 %v1623
    %1641 = vmatmul.f32.gmra.mxu0 %v1379
    %v1642 = vpop.f32.mrf.mxu0
    %v1643 = vadd.f32 0.0, %v1642
    %1644 = vdwg.mxu0
    %v1645 = vadd.f32 %v1619, %v1643
    %v1646 = vld [vmem:[%s8] sm:$0xf]
    %v1647 = vadd.f32 %v1645, %v1646
    %v1648 = vld [vmem:[%s9] sm:$0x1]
    %v1649 = vld [vmem:[#allocation2] sm:$0x1]
    %v1651 = vsel %vm1326, %v1648, 0
    %v1654 = vsel %vm1304, %v1647, 0
    %1656 = vmatpush.msra.mxu0 0.0
    %1657 = vmatpush.msra.mxu0 0.0
    %1658 = vmatpush.msra.mxu0 0.0
    %1659 = vmatpush.msra.mxu0 0.0
    %1660 = vmatpush.msra.mxu0 0.0
    %1661 = vmatpush.msra.mxu0 0.0
    %1662 = vmatpush.msra.mxu0 0.0
    %1663 = vmatpush.msra.mxu0 0.0
    %1664 = vmatpush.msra.mxu0 0.0
    %1665 = vmatpush.msra.mxu0 0.0
    %1666 = vmatpush.msra.mxu0 0.0
    %1667 = vmatpush.msra.mxu0 0.0
    %1668 = vmatpush.msra.mxu0 0.0
    %1669 = vmatpush.msra.mxu0 0.0
    %1670 = vmatpush.msra.mxu0 0.0
    %1671 = vmatpush.msra.mxu0 %v1654
    %1672 = vmatmul.f32.gmra.mxu0 %v1651
    %v1673 = vpop.f32.mrf.mxu0
    %v1674 = vadd.f32 %v1649, %v1673
    %1675 = vdwg.mxu0
    %v1676 = vmax.f32 %v1674, 0.0
    %v1677 = vand.u32 2147483647, %v1674
    %v1678 = vsub.f32 0.0, %v1677
    %v1679 = vmul.f32 %v1678, 1.442695
    %v1680 = vpow.pop %v1679
    %v1681 = vadd.f32 %v1680, 1.0
    %v1682 = vlog2.pop %v1681
    %v1683 = vmul.f32 %v1682, 0.6931472
    %v1684 = vadd.f32 %v1676, %v1683
    %v1685 = vtanh.pop %v1684
    %v1686 = vmul.f32 %v1674, %v1685
    %v1687 = vld [vmem:[%s11] sm:$0x7]
    %v1688 = vld [vmem:[%s12] sm:$0x7]
    %v1690 = vsel %vm1448, %v1687, 0
    %v1693 = vsel %vm1452, %v1686, 0
    %1695 = vmatpush.msra.mxu0 0.0
    %1696 = vmatpush.msra.mxu0 0.0
    %1697 = vmatpush.msra.mxu0 0.0
    %1698 = vmatpush.msra.mxu0 0.0
    %1699 = vmatpush.msra.mxu0 0.0
    %1700 = vmatpush.msra.mxu0 0.0
    %1701 = vmatpush.msra.mxu0 0.0
    %1702 = vmatpush.msra.mxu0 0.0
    %1703 = vmatpush.msra.mxu0 0.0
    %1704 = vmatpush.msra.mxu0 0.0
    %1705 = vmatpush.msra.mxu0 0.0
    %1706 = vmatpush.msra.mxu0 0.0
    %1707 = vmatpush.msra.mxu0 0.0
    %1708 = vmatpush.msra.mxu0 0.0
    %1709 = vmatpush.msra.mxu0 0.0
    %1710 = vmatpush.msra.mxu0 %v1693
    %1711 = vmatmul.f32.gmra.mxu0 %v1690
    %v1712 = vpop.f32.mrf.mxu0
    %v1713 = vadd.f32 %v1688, %v1712
    %1714 = vdwg.mxu0
    %v1716 = vrot.slane %v1713, 1
    %v1718 = vmax.f32 %v1713, %v1716
    %v1719 = vrot.slane %v1713, 2
    %v1721 = vmax.f32 %v1718, %v1719
    %v1722 = vsub.f32 %v1713, %v1721
    %v1723 = vmul.f32 %v1722, 1.442695
    %v1724 = vpow.pop %v1723
    %v1726 = vrot.slane %v1721, 7
    %v1728 = vsub.f32 %v1713, %v1726
    %v1729 = vmul.f32 %v1728, 1.442695
    %v1730 = vpow.pop %v1729
    %v1731 = vrot.slane %v1721, 6
    %v1733 = vsub.f32 %v1713, %v1731
    %v1734 = vmul.f32 %v1733, 1.442695
    %v1735 = vpow.pop %v1734
    %v1737 = vrot.slane %v1730, 1
    %v1739 = vadd.f32 %v1724, %v1737
    %v1741 = vrot.slane %v1735, 2
    %v1743 = vadd.f32 %v1739, %v1741
    %v1744 = vrcp.pop %v1743
    %v1745 = vmul.f32 %v1743, %v1744
    %v1746 = vsub.f32 1.0, %v1745
    %v1747 = vmul.f32 %v1744, %v1746
    %v1748 = vadd.f32 %v1744, %v1747
    %vm1749 = vweird.f32 %v1743
    %vm1750 = vweird.f32 %v1744
    %vm1751 = vmor %vm1749, %vm1750
    %v1752 = vsel %vm1751, %v1744, %v1748
    %v1753 = vand.u32 2147483647, %v1743
    %vm1754 = vcmp.eq.f32.partialorder %v1753, 8.507059e+37
    %v1755 = vand.u32 %v1743, 2147483648
    %v1756 = vor.u32 1.1754944e-38, %v1755
    %v1757 = vsel %vm1754, %v1756, %v1752
    %v1758 = vmul.f32 1.0, %v1757
    %v1759 = vmul.f32 %v1724, %v1758
    %v1761 = vrot.slane %v1758, 7
    %v1763 = vmul.f32 %v1730, %v1761
    %v1764 = vrot.slane %v1758, 6
    %v1766 = vmul.f32 %v1735, %v1764
    %s1768 = vtos %v1759
    %v1769 = vstv %s1768
    %v1771 = vmul.f32 %v1769, %v1285
    %v1772 = vmul.f32 %v1769, %v1286
    %v1774 = vrot.slane %v1763, 1
    %s1775 = vtos %v1774
    %v1776 = vstv %s1775
    %v1778 = vmul.f32 %v1776, %v1293
    %v1779 = vmul.f32 %v1776, %v1294
    %v1780 = vadd.f32 %v1771, %v1778
    %v1781 = vadd.f32 %v1772, %v1779
    %v1783 = vrot.slane %v1766, 2
    %s1784 = vtos %v1783
    %v1785 = vstv %s1784
    %v1787 = vmul.f32 %v1785, %v1301
    %v1788 = vmul.f32 %v1785, %v1302
    %v1789 = vadd.f32 %v1780, %v1787
    %v1790 = vadd.f32 %v1781, %v1788
    %1791 = vst [vmem:[#allocation11] sm:$0xf0] %v1789
    %1792 = vst [vmem:[#allocation11 + $0x8] sm:$0xf0] %v1790
    // Predicated region
    $region78: #{tpu_custom_call.1} parent=1 // pred_check
      _
    $region79: #{tpu_custom_call.1} parent=1 // pred_check_branch
      %1794 = sbr.rel (0) target = $region81
    $region80: #{tpu_custom_call.1} parent=1 // pred_region
      %1796 = vsyncadd [#allocation5], 0
      %s1798 = sshll.u32 [#allocation11], 4
      %s1799 = int_to_ptr.vmem [resolvable:$true] %s1798
      %s1800 = sshll.u32 %s15, 4
      %s1801 = int_to_ptr.hbm [resolvable:$true] %s1800
      %1803 = dma.vmem_to_hbm [thread:$0]  %s1799, 256, %s1801, [#allocation5]
    $region81: #{tpu_custom_call.1} parent=1 // pred_fallthru
      _
    // Predicated region
    $region82: #{tpu_custom_call.1} parent=1 // pred_check
      _
    $region83: #{tpu_custom_call.1} parent=1 // pred_check_branch
      %1805 = sbr.rel (0) target = $region85
    $region84: #{tpu_custom_call.1} parent=1 // pred_region
      %1807 = dma.done [#allocation5], 256
    $region85: #{tpu_custom_call.1} parent=1 // pred_fallthru
      _
    %1808 = vsyncpa [#allocation4], 1
    %1809 = vsyncpa [#allocation7], 1
    %1810 = vsyncpa [#allocation10], 1
    %1811 = vsyncpa [#allocation5], 1

</llo_original>
